<compile_context>
chip_gen: v7x
topology: tpu7x:2x2x1
jax: 0.10.0
libtpu: 0.0.40
codegen_flags: <defaults>
</compile_context>

<pallas_src>
import functools
from math import sqrt

import jax
import jax.numpy as jnp
from jax.experimental import pallas as pl
from jax.experimental.pallas import tpu as pltpu


# Flip to move GELU work from the VPU erf polynomial to the EUP (tanh approx, ~1e-3
# deviation from torch's exact GELU) if a bundle dump shows VALU as the binding slot.
_USE_TANH_GELU = False


# ----------------------------- small math helpers -----------------------------

def _layernorm(x, gamma, beta, eps=1e-5):
    mu = jnp.mean(x, axis=-1, keepdims=True)
    var = jnp.mean((x - mu) ** 2, axis=-1, keepdims=True)
    return (x - mu) * jax.lax.rsqrt(var + eps) * gamma + beta


def _erf(x):
    # Abramowitz & Stegun 7.1.26 polynomial (|err| <= 1.5e-7, float32-exact);
    # used instead of lax.erf so the kernel lowers on Mosaic without an erf rule.
    a1, a2, a3, a4, a5 = 0.254829592, -0.284496736, 1.421413741, -1.453152027, 1.061405429
    p = 0.3275911
    s = jnp.where(x >= 0.0, 1.0, -1.0)
    ax = jnp.abs(x)
    t = 1.0 / (1.0 + p * ax)
    poly = ((((a5 * t + a4) * t + a3) * t + a2) * t + a1) * t
    return s * (1.0 - poly * jnp.exp(-ax * ax))


def _gelu(x):
    if _USE_TANH_GELU:
        return 0.5 * x * (1.0 + jnp.tanh(0.7978845608028654 * (x + 0.044715 * x * x * x)))
    # exact (erf-based) GELU, matching torch.nn.GELU() default.
    return 0.5 * x * (1.0 + _erf(x * 0.7071067811865476))


# ------------------------------- Pallas kernel --------------------------------

def _point_replacer_kernel(
    points_ref,                                     # (G, N, 3)
    # enc: Linear(3,dim) -> LayerNorm -> GELU  (second Linear folded into w_enc_qkv)
    enc_w1, enc_b1, enc_ln_g, enc_ln_b,
    # fused enc-Linear2 + to_qkv projection (1/sqrt(dim) folded into the q chunk)
    w_enc_qkv, b_enc_qkv,
    # memory-bank k / q^T(scaled) / v rows (cloud independent, precomputed in wrapper)
    mem_k, mem_qT, mem_v,
    # fused decoders (LayerNorm affines folded into w_dec1 / b_dec1)
    w_dec1, b_dec1, w_fin_t, b_fin,
    # output: (1, 8, G*NM) slab; rows 0-2 rec xyz, row 3 conf, rows 4-7 zero pad
    out_ref,
    *, G, N, M, dim,
):
    NM = N + M
    f32 = jnp.float32
    x = points_ref[...].reshape(G * N, 3)

    # ---------------- enc (all G clouds stacked row-wise) ----------------
    h = jnp.dot(x, enc_w1[...], preferred_element_type=f32) + enc_b1[...]
    h = _gelu(_layernorm(h, enc_ln_g[...], enc_ln_b[...]))

    # enc second Linear + to_qkv fused into one (dim, 3*dim) matmul
    # TODO(synk): pad each q/k/v chunk to a 128-lane boundary if the MLIR shows
    # relayout copies at these 32-wide lane slices.
    qkv = jnp.dot(h, w_enc_qkv[...], preferred_element_type=f32) + b_enc_qkv[...]
    qf = qkv[:, 0:dim].reshape(G, N, dim)            # pre-scaled by 1/sqrt(dim)
    kf = qkv[:, dim:2 * dim].reshape(G, N, dim)
    vf = qkv[:, 2 * dim:3 * dim].reshape(G, N, dim)

    # ------- SelfAttentionMemoryBank, blocked (no q/v broadcast+concat) -------
    # Output rows are indexed by the *key* rows, so only the key side needs all NM rows
    # per cloud; memory queries/values are shared across clouds -> stacked matmuls.
    k_cat = jnp.concatenate(
        [kf, jnp.broadcast_to(mem_k[...][None], (G, M, dim))], axis=1)       # (G, NM, dim)

    # feature-query columns: per-cloud batched matmul
    l_f = jnp.einsum('gid,gjd->gij', k_cat, qf, preferred_element_type=f32)  # (G, NM, N)
    # memory-query columns: one stacked matmul against the shared scaled mem queries
    l_m = jnp.dot(k_cat.reshape(G * NM, dim), mem_qT[...],
                  preferred_element_type=f32).reshape(G, NM, M)              # (G, NM, M)

    # torch softmax(dim=1): normalize over the key axis; one reciprocal per column
    cmax_f = jnp.max(l_f, axis=1, keepdims=True)
    e_f = jnp.exp(l_f - cmax_f)
    a_f = e_f * (1.0 / jnp.sum(e_f, axis=1, keepdims=True))                  # (G, NM, N)

    cmax_m = jnp.max(l_m, axis=1, keepdims=True)
    e_m = jnp.exp(l_m - cmax_m)
    a_m = e_m * (1.0 / jnp.sum(e_m, axis=1, keepdims=True))                  # (G, NM, M)

    # feat_mem[g,i] = sum_{j<N} a_f[g,i,j] v_f[g,j]  +  sum_m a_m[g,i,m] v_mem[m]
    feat_mem = (jnp.einsum('gij,gjd->gid', a_f, vf,
                           preferred_element_type=f32).reshape(G * NM, dim)
                + jnp.dot(a_m.reshape(G * NM, M), mem_v[...],
                          preferred_element_type=f32))                       # (G*NM, dim)

    # ---------------- fused decoders ----------------
    # one shared LayerNorm (affines folded into w_dec1 / b_dec1 in the wrapper)
    mu = jnp.mean(feat_mem, axis=-1, keepdims=True)
    var = jnp.mean((feat_mem - mu) ** 2, axis=-1, keepdims=True)
    xhat = (feat_mem - mu) * jax.lax.rsqrt(var + 1e-5)

    # [dec_pc.Linear1 | dec_conf.Linear1] as one wide matmul, then GELU
    hpc = _gelu(jnp.dot(xhat, w_dec1[...], preferred_element_type=f32) + b_dec1[...])

    # fused final layers (block-diagonal), emitted transposed & sublane-padded to 8 rows
    rc_t = jax.lax.dot_general(w_fin_t[...], hpc, (((1,), (1,)), ((), ())),
                               preferred_element_type=f32) + b_fin[...]
    out_ref[0] = rc_t                                                        # (8, G*NM)


# ------------------------------ plain-JAX glue --------------------------------

def _mask_and_pack(pts_flat, rec, conf, B, L, N, C, M):
    """topk-based masking + concat + reshape (cheap glue, kept in plain JAX)."""
    NM = N + M
    # PyTorch: conf[i,:,0].topk(M, largest=False) -> indices of the M smallest.
    # (tie-breaking is implementation-defined in torch; lax.top_k is deterministic)
    _, idx = jax.lax.top_k(-conf[:, :, 0], M)                                # (BL, M)
    removed = jnp.sum(jax.nn.one_hot(idx, NM, dtype=jnp.float32), axis=1) > 0
    mask_keep = jnp.logical_not(removed)                                     # (BL, NM) bool
    points_new = jnp.concatenate([pts_flat, rec[:, N:, :]], axis=1)          # (BL, NM, 3)
    points_masked = points_new * mask_keep[:, :, None].astype(points_new.dtype)
    points_masked = points_masked.reshape(B, L, NM, C)
    conf_out = conf[:, :N, :].reshape(B, L, N, 1)
    return points_masked, conf_out


def _vmem_budget_bytes():
    """Generation-aware scoped-VMEM budget (~70% of per-core VMEM), 32 MiB fallback."""
    try:
        info = pltpu.get_tpu_info()
        cap = None
        for name in ("vmem_capacity_bytes", "vmem_size_bytes", "vmem_bytes"):
            cap = getattr(info, name, None)
            if cap:
                break
        if cap:
            return int(min(cap * 0.7, 96 * 1024 * 1024))
    except Exception:
        pass
    return 32 * 1024 * 1024


def _choose_grid(BL, NM, *, vmem_budget, min_steps=2):
    """Pick clouds-per-step G and step count S (BL is padded up to G*S).

    Per-grid-step overhead (~0.35us) dwarfs per-cloud compute at these shapes, so:
    minimize step count first, then prefer a lane-dense (G*NM % 128 == 0) output slab,
    then minimize padding waste.  min_steps=2 keeps both TensorCores busy on a 2-TC
    chip (v7x); the extra step is noise on 1-TC v5e/v6e.
    """
    per_cloud_bytes = 64 * 1024          # generous bound on live f32 intermediates/cloud
    g_cap = max(1, min(256, (vmem_budget // 4) // per_cloud_bytes, BL))
    steps_floor = min_steps if BL >= min_steps else 1
    best = None
    for g in range(1, g_cap + 1):
        s = max(steps_floor, -(-BL // g))
        pad = s * g - BL
        key = (s, 0 if (g * NM) % 128 == 0 else 1, pad, -g)
        if best is None or key < best[0]:
            best = (key, g, s)
    return best[1], best[2]


@functools.partial(jax.jit, static_argnames=("num_to_add",))
def point_replacer_forward(points, params, num_to_add):
    B, L, N, C = points.shape
    M = num_to_add
    NM = N + M
    BL = B * L
    dim = params["enc_w1"].shape[1]
    f32 = jnp.float32
    p = params
    pts = points.reshape(BL, N, C).astype(f32)

    vmem_budget = _vmem_budget_bytes()
    G, S = _choose_grid(BL, NM, vmem_budget=vmem_budget)
    BLp = G * S
    pts_p = pts if BLp == BL else jnp.concatenate(
        [pts, jnp.zeros((BLp - BL, N, C), f32)], axis=0)

    # ---- one-off wrapper-side parameter fusion / precompute (tiny XLA ops) ----
    inv_sqrt_d = 1.0 / sqrt(dim)
    wq_s = p["wq"] * inv_sqrt_d                                              # scale folded into q
    w_qkv = jnp.concatenate([wq_s, p["wk"], p["wv"]], axis=1)                # (dim, 3*dim)
    w_enc_qkv = p["enc_w2"] @ w_qkv                                          # enc Linear2 folded in
    b_enc_qkv = p["enc_b2"] @ w_qkv
    mem = p["mem_key"].astype(f32)                                           # (M, dim)
    mem_qT = (mem @ wq_s).T                                                  # (dim, M), scaled
    mem_k = mem @ p["wk"]                                                    # (M, dim)
    mem_v = mem @ p["wv"]                                                    # (M, dim)
    # fold decoder LayerNorm affine into the first decoder Linear: W' = diag(g)W, b' = bW + b1
    w_dec1 = jnp.concatenate(
        [p["pc_ln_g"].reshape(dim, 1) * p["pc_w1"],
         p["conf_ln_g"].reshape(dim, 1) * p["conf_w1"]], axis=1)             # (dim, 2*dim)
    b_dec1 = jnp.concatenate(
        [p["pc_ln_b"] @ p["pc_w1"] + p["pc_b1"],
         p["conf_ln_b"] @ p["conf_w1"] + p["conf_b1"]], axis=1)              # (1, 2*dim)
    w_fin = jnp.concatenate(
        [jnp.concatenate([p["pc_w2"], jnp.zeros((dim, 1), f32)], axis=1),
         jnp.concatenate([jnp.zeros((dim, 3), f32), p["conf_w2"]], axis=1)],
        axis=0)                                                              # (2*dim, 4)
    w_fin_t = jnp.concatenate([w_fin.T, jnp.zeros((4, 2 * dim), f32)], axis=0)  # (8, 2*dim)
    b_fin = jnp.concatenate([p["pc_b2"], p["conf_b2"], jnp.zeros((1, 4), f32)],
                            axis=1).reshape(8, 1)

    param_arrays = (p["enc_w1"], p["enc_b1"], p["enc_ln_g"], p["enc_ln_b"],
                    w_enc_qkv, b_enc_qkv, mem_k, mem_qT, mem_v,
                    w_dec1, b_dec1, w_fin_t, b_fin)

    def const_spec(a):
        # constant index_map -> the parameter block stays resident across grid steps.
        # TODO(synk): pipeline_mode=pl.Buffered(1) would halve resident param VMEM;
        # negligible at dim=32 so left at the default.
        return pl.BlockSpec(a.shape, lambda i, n=a.ndim: (0,) * n)

    kernel = functools.partial(_point_replacer_kernel, G=G, N=N, M=M, dim=dim)

    out = pl.pallas_call(
        kernel,
        out_shape=jax.ShapeDtypeStruct((S, 8, G * NM), f32),
        grid_spec=pltpu.PrefetchScalarGridSpec(
            num_scalar_prefetch=0,
            grid=(S,),
            in_specs=(pl.BlockSpec((G, N, C), lambda i: (i, 0, 0)),)
                     + tuple(const_spec(a) for a in param_arrays),
            out_specs=pl.BlockSpec((1, 8, G * NM), lambda i: (i, 0, 0)),
        ),
        compiler_params=pltpu.CompilerParams(
            dimension_semantics=("parallel",),
            vmem_limit_bytes=vmem_budget),
    )(pts_p, *param_arrays)

    # unpack the slab: rows 0-2 = rec xyz, row 3 = conf, rows 4-7 = pad; drop padded clouds
    out4 = out.reshape(S, 8, G, NM)[:, :4].transpose(0, 2, 3, 1).reshape(BLp, NM, 4)
    out4 = out4[:BL]
    rec = out4[:, :, 0:3]                                                    # (BL, NM, 3)
    conf = out4[:, :, 3:4]                                                   # (BL, NM, 1)

    # F.mse_loss(points_rec[:, :N, :], points)  (mean reduction) — cheap, done in JAX
    l_prec = jnp.mean((rec[:, :N, :] - pts) ** 2)
    points_masked, conf_out = _mask_and_pack(pts, rec, conf, B, L, N, C, M)
    return points_masked, conf_out, l_prec


# ------------------------- deterministic parameter init -----------------------

def init_params(key, dim, num_to_add):
    ks = jax.random.split(key, 16)

    def w(k, fan_in, fan_out):
        return (jax.random.normal(k, (fan_in, fan_out), jnp.float32)
                / jnp.sqrt(jnp.float32(fan_in)))

    def b(k, fan_out):
        return 0.01 * jax.random.normal(k, (1, fan_out), jnp.float32)

    ones = lambda n: jnp.ones((1, n), jnp.float32)
    zeros = lambda n: jnp.zeros((1, n), jnp.float32)

    return dict(
        enc_w1=w(ks[0], 3, dim), enc_b1=b(ks[1], dim),
        enc_ln_g=ones(dim), enc_ln_b=zeros(dim),
        enc_w2=w(ks[2], dim, dim), enc_b2=b(ks[3], dim),
        # mem ~ N(0,1) with torch shape (1, dim, M); we store mem.transpose(1,2) == (M, dim)
        mem_key=jax.random.normal(ks[4], (num_to_add, dim), jnp.float32),
        # to_qkv (bias-free) split into the three chunks of its output
        wq=w(ks[5], dim, dim), wk=w(ks[6], dim, dim), wv=w(ks[7], dim, dim),
        pc_ln_g=ones(dim), pc_ln_b=zeros(dim),
        pc_w1=w(ks[8], dim, dim), pc_b1=b(ks[9], dim),
        pc_w2=w(ks[10], dim, 3), pc_b2=b(ks[11], 3),
        conf_ln_g=ones(dim), conf_ln_b=zeros(dim),
        conf_w1=w(ks[12], dim, dim), conf_b1=b(ks[13], dim),
        conf_w2=w(ks[14], dim, 1), conf_b2=b(ks[15], 1),
    )


# ----------------------------- pure-JAX reference ------------------------------

def reference_forward(points, params, num_to_add):
    B, L, N, C = points.shape
    BL = B * L
    M = num_to_add
    dim = params["enc_w1"].shape[1]
    p = params
    pts = points.reshape(BL, N, C).astype(jnp.float32)

    h = pts @ p["enc_w1"] + p["enc_b1"]
    h = _gelu(_layernorm(h, p["enc_ln_g"], p["enc_ln_b"]))
    feat = h @ p["enc_w2"] + p["enc_b2"]

    mkey = jnp.broadcast_to(p["mem_key"], (BL, M, dim))
    xm = jnp.concatenate([feat, mkey], axis=1)
    q, k, v = xm @ p["wq"], xm @ p["wk"], xm @ p["wv"]
    logits = jnp.einsum("bid,bjd->bij", k, q) / jnp.sqrt(jnp.float32(dim))
    attn = jax.nn.softmax(logits, axis=1)
    feat_mem = jnp.einsum("bij,bjd->bid", attn, v)

    hc = _gelu(_layernorm(feat_mem, p["conf_ln_g"], p["conf_ln_b"]) @ p["conf_w1"] + p["conf_b1"])
    conf = hc @ p["conf_w2"] + p["conf_b2"]
    hp = _gelu(_layernorm(feat_mem, p["pc_ln_g"], p["pc_ln_b"]) @ p["pc_w1"] + p["pc_b1"])
    rec = hp @ p["pc_w2"] + p["pc_b2"]

    l_prec = jnp.mean((rec[:, :N, :] - pts) ** 2)
    points_masked, conf_out = _mask_and_pack(pts, rec, conf, B, L, N, C, M)
    return points_masked, conf_out, l_prec


# ------------------------------------ main -------------------------------------

if __name__ == "__main__":
    B, L, N, C = 2, 2, 16, 3
    dim, heads, dim_head, num_to_add = 32, 4, 8, 8   # heads/dim_head unused in forward

    key = jax.random.PRNGKey(0)
    k_params, k_pts = jax.random.split(key)
    params = init_params(k_params, dim, num_to_add)
    points = jax.random.normal(k_pts, (B, L, N, C), jnp.float32)

    pm, cf, lp = point_replacer_forward(points, params, num_to_add)
    jax.block_until_ready((pm, cf, lp))

    # shape checks + pure-JAX reference check
    assert pm.shape == (B, L, N + num_to_add, C)
    assert cf.shape == (B, L, N, 1)
    pm_r, cf_r, lp_r = reference_forward(points, params, num_to_add)
    assert jnp.allclose(cf, cf_r, atol=1e-4, rtol=1e-4)
    assert jnp.allclose(pm, pm_r, atol=1e-4, rtol=1e-4)
    assert jnp.allclose(lp, lp_r, atol=1e-4, rtol=1e-4)

    print("KERNEL_OK")
</pallas_src>

<mosaic_0001>
module attributes {stable_mosaic.version = 11 : i64} {
  func.func @_point_replacer_kernel(%arg0: i32, %arg1: memref<2x16x3xf32, #tpu.memory_space<vmem>>, %arg2: memref<3x32xf32, #tpu.memory_space<vmem>>, %arg3: memref<1x32xf32, #tpu.memory_space<vmem>>, %arg4: memref<1x32xf32, #tpu.memory_space<vmem>>, %arg5: memref<1x32xf32, #tpu.memory_space<vmem>>, %arg6: memref<32x96xf32, #tpu.memory_space<vmem>>, %arg7: memref<1x96xf32, #tpu.memory_space<vmem>>, %arg8: memref<8x32xf32, #tpu.memory_space<vmem>>, %arg9: memref<32x8xf32, #tpu.memory_space<vmem>>, %arg10: memref<8x32xf32, #tpu.memory_space<vmem>>, %arg11: memref<32x64xf32, #tpu.memory_space<vmem>>, %arg12: memref<1x64xf32, #tpu.memory_space<vmem>>, %arg13: memref<8x64xf32, #tpu.memory_space<vmem>>, %arg14: memref<8x1xf32, #tpu.memory_space<vmem>>, %arg15: memref<1x8x48xf32, #tpu.memory_space<vmem>>) attributes {dimension_semantics = [#tpu.dimension_semantics<parallel>], iteration_bounds = array<i64: 2>, scalar_prefetch = 0 : i64, scratch_operands = 0 : i64, tpu.core_type = #tpu.core_type<tc>, window_params = [{transform_indices = @transform_0, window_bounds = array<i64: 2, 16, 3>}, {pipeline_mode = #tpu.pipeline_mode<synchronous>, transform_indices = @transform_1, window_bounds = array<i64: 3, 32>}, {pipeline_mode = #tpu.pipeline_mode<synchronous>, transform_indices = @transform_2, window_bounds = array<i64: 1, 32>}, {pipeline_mode = #tpu.pipeline_mode<synchronous>, transform_indices = @transform_3, window_bounds = array<i64: 1, 32>}, {pipeline_mode = #tpu.pipeline_mode<synchronous>, transform_indices = @transform_4, window_bounds = array<i64: 1, 32>}, {pipeline_mode = #tpu.pipeline_mode<synchronous>, transform_indices = @transform_5, window_bounds = array<i64: 32, 96>}, {pipeline_mode = #tpu.pipeline_mode<synchronous>, transform_indices = @transform_6, window_bounds = array<i64: 1, 96>}, {pipeline_mode = #tpu.pipeline_mode<synchronous>, transform_indices = @transform_7, window_bounds = array<i64: 8, 32>}, {pipeline_mode = #tpu.pipeline_mode<synchronous>, transform_indices = @transform_8, window_bounds = array<i64: 32, 8>}, {pipeline_mode = #tpu.pipeline_mode<synchronous>, transform_indices = @transform_9, window_bounds = array<i64: 8, 32>}, {pipeline_mode = #tpu.pipeline_mode<synchronous>, transform_indices = @transform_10, window_bounds = array<i64: 32, 64>}, {pipeline_mode = #tpu.pipeline_mode<synchronous>, transform_indices = @transform_11, window_bounds = array<i64: 1, 64>}, {pipeline_mode = #tpu.pipeline_mode<synchronous>, transform_indices = @transform_12, window_bounds = array<i64: 8, 64>}, {pipeline_mode = #tpu.pipeline_mode<synchronous>, transform_indices = @transform_13, window_bounds = array<i64: 8, 1>}, {transform_indices = @transform_14, window_bounds = array<i64: 1, 8, 48>}]} {
    %c0 = arith.constant 0 : index
    %c0_0 = arith.constant 0 : index
    %c0_1 = arith.constant 0 : index
    %0 = vector.load %arg1[%c0, %c0_0, %c0_1] : memref<2x16x3xf32, #tpu.memory_space<vmem>>, vector<2x16x3xf32>
    %1 = vector.shape_cast %0 : vector<2x16x3xf32> to vector<32x3xf32>
    %c0_2 = arith.constant 0 : index
    %c0_3 = arith.constant 0 : index
    %2 = vector.load %arg2[%c0_2, %c0_3] : memref<3x32xf32, #tpu.memory_space<vmem>>, vector<3x32xf32>
    %cst = arith.constant dense<0.000000e+00> : vector<32x32xf32>
    %3 = tpu.matmul %1, %2, %cst {dimension_numbers = #tpu.dot_dimension_numbers<[1], [0], [0], [1], [0, 0, 1, 1], [], []>} : vector<32x3xf32>, vector<3x32xf32>, vector<32x32xf32> -> vector<32x32xf32>
    %c0_4 = arith.constant 0 : index
    %c0_5 = arith.constant 0 : index
    %4 = vector.load %arg3[%c0_4, %c0_5] : memref<1x32xf32, #tpu.memory_space<vmem>>, vector<1x32xf32>
    %5 = vector.broadcast %4 : vector<1x32xf32> to vector<32x32xf32>
    %6 = arith.addf %3, %5 : vector<32x32xf32>
    %c0_6 = arith.constant 0 : index
    %c0_7 = arith.constant 0 : index
    %7 = vector.load %arg4[%c0_6, %c0_7] : memref<1x32xf32, #tpu.memory_space<vmem>>, vector<1x32xf32>
    %c0_8 = arith.constant 0 : index
    %c0_9 = arith.constant 0 : index
    %8 = vector.load %arg5[%c0_8, %c0_9] : memref<1x32xf32, #tpu.memory_space<vmem>>, vector<1x32xf32>
    %cst_10 = arith.constant dense<0.000000e+00> : vector<32xf32>
    %9 = vector.multi_reduction <add>, %6, %cst_10 [1] : vector<32x32xf32> to vector<32xf32>
    %10 = vector.shape_cast %9 : vector<32xf32> to vector<32x1xf32>
    %cst_11 = arith.constant 3.200000e+01 : f32
    %11 = vector.broadcast %cst_11 : f32 to vector<32x1xf32>
    %12 = arith.divf %10, %11 : vector<32x1xf32>
    %13 = vector.broadcast %12 : vector<32x1xf32> to vector<32x32xf32>
    %14 = arith.subf %6, %13 : vector<32x32xf32>
    %15 = arith.mulf %14, %14 : vector<32x32xf32>
    %cst_12 = arith.constant dense<0.000000e+00> : vector<32xf32>
    %16 = vector.multi_reduction <add>, %15, %cst_12 [1] : vector<32x32xf32> to vector<32xf32>
    %17 = vector.shape_cast %16 : vector<32xf32> to vector<32x1xf32>
    %cst_13 = arith.constant 3.200000e+01 : f32
    %18 = vector.broadcast %cst_13 : f32 to vector<32x1xf32>
    %19 = arith.divf %17, %18 : vector<32x1xf32>
    %20 = vector.broadcast %12 : vector<32x1xf32> to vector<32x32xf32>
    %21 = arith.subf %6, %20 : vector<32x32xf32>
    %cst_14 = arith.constant 9.99999974E-6 : f32
    %22 = vector.broadcast %cst_14 : f32 to vector<32x1xf32>
    %23 = arith.addf %19, %22 : vector<32x1xf32>
    %24 = math.rsqrt %23 : vector<32x1xf32>
    %25 = vector.broadcast %24 : vector<32x1xf32> to vector<32x32xf32>
    %26 = arith.mulf %21, %25 : vector<32x32xf32>
    %27 = vector.broadcast %7 : vector<1x32xf32> to vector<32x32xf32>
    %28 = arith.mulf %26, %27 : vector<32x32xf32>
    %29 = vector.broadcast %8 : vector<1x32xf32> to vector<32x32xf32>
    %30 = arith.addf %28, %29 : vector<32x32xf32>
    %cst_15 = arith.constant 5.000000e-01 : f32
    %31 = vector.broadcast %cst_15 : f32 to vector<32x32xf32>
    %32 = arith.mulf %31, %30 : vector<32x32xf32>
    %cst_16 = arith.constant 0.707106769 : f32
    %33 = vector.broadcast %cst_16 : f32 to vector<32x32xf32>
    %34 = arith.mulf %30, %33 : vector<32x32xf32>
    %cst_17 = arith.constant 0.000000e+00 : f32
    %35 = vector.broadcast %cst_17 : f32 to vector<32x32xf32>
    %36 = arith.cmpf oge, %34, %35 : vector<32x32xf32>
    %cst_18 = arith.constant 1.000000e+00 : f32
    %cst_19 = arith.constant -1.000000e+00 : f32
    %37 = vector.broadcast %cst_18 : f32 to vector<32x32xf32>
    %38 = vector.broadcast %cst_19 : f32 to vector<32x32xf32>
    %39 = arith.select %36, %37, %38 : vector<32x32xi1>, vector<32x32xf32>
    %40 = math.absf %34 : vector<32x32xf32>
    %cst_20 = arith.constant 0.327591091 : f32
    %41 = vector.broadcast %cst_20 : f32 to vector<32x32xf32>
    %42 = arith.mulf %41, %40 : vector<32x32xf32>
    %cst_21 = arith.constant 1.000000e+00 : f32
    %43 = vector.broadcast %cst_21 : f32 to vector<32x32xf32>
    %44 = arith.addf %43, %42 : vector<32x32xf32>
    %cst_22 = arith.constant 1.000000e+00 : f32
    %45 = vector.broadcast %cst_22 : f32 to vector<32x32xf32>
    %46 = arith.divf %45, %44 : vector<32x32xf32>
    %cst_23 = arith.constant 1.06140542 : f32
    %47 = vector.broadcast %cst_23 : f32 to vector<32x32xf32>
    %48 = arith.mulf %47, %46 : vector<32x32xf32>
    %cst_24 = arith.constant -1.45315206 : f32
    %49 = vector.broadcast %cst_24 : f32 to vector<32x32xf32>
    %50 = arith.addf %48, %49 : vector<32x32xf32>
    %51 = arith.mulf %50, %46 : vector<32x32xf32>
    %cst_25 = arith.constant 1.42141378 : f32
    %52 = vector.broadcast %cst_25 : f32 to vector<32x32xf32>
    %53 = arith.addf %51, %52 : vector<32x32xf32>
    %54 = arith.mulf %53, %46 : vector<32x32xf32>
    %cst_26 = arith.constant -0.284496725 : f32
    %55 = vector.broadcast %cst_26 : f32 to vector<32x32xf32>
    %56 = arith.addf %54, %55 : vector<32x32xf32>
    %57 = arith.mulf %56, %46 : vector<32x32xf32>
    %cst_27 = arith.constant 0.254829586 : f32
    %58 = vector.broadcast %cst_27 : f32 to vector<32x32xf32>
    %59 = arith.addf %57, %58 : vector<32x32xf32>
    %60 = arith.mulf %59, %46 : vector<32x32xf32>
    %cst_28 = arith.constant 0.000000e+00 : f32
    %61 = vector.broadcast %cst_28 : f32 to vector<32x32xf32>
    %62 = arith.subf %61, %40 : vector<32x32xf32>
    %63 = arith.mulf %62, %40 : vector<32x32xf32>
    %64 = math.exp %63 : vector<32x32xf32>
    %65 = arith.mulf %60, %64 : vector<32x32xf32>
    %cst_29 = arith.constant 1.000000e+00 : f32
    %66 = vector.broadcast %cst_29 : f32 to vector<32x32xf32>
    %67 = arith.subf %66, %65 : vector<32x32xf32>
    %68 = arith.mulf %39, %67 : vector<32x32xf32>
    %cst_30 = arith.constant 1.000000e+00 : f32
    %69 = vector.broadcast %cst_30 : f32 to vector<32x32xf32>
    %70 = arith.addf %69, %68 : vector<32x32xf32>
    %71 = arith.mulf %32, %70 : vector<32x32xf32>
    %c0_31 = arith.constant 0 : index
    %c0_32 = arith.constant 0 : index
    %72 = vector.load %arg6[%c0_31, %c0_32] : memref<32x96xf32, #tpu.memory_space<vmem>>, vector<32x96xf32>
    %cst_33 = arith.constant dense<0.000000e+00> : vector<32x96xf32>
    %73 = tpu.matmul %71, %72, %cst_33 {dimension_numbers = #tpu.dot_dimension_numbers<[1], [0], [0], [1], [0, 0, 1, 1], [], []>} : vector<32x32xf32>, vector<32x96xf32>, vector<32x96xf32> -> vector<32x96xf32>
    %c0_34 = arith.constant 0 : index
    %c0_35 = arith.constant 0 : index
    %74 = vector.load %arg7[%c0_34, %c0_35] : memref<1x96xf32, #tpu.memory_space<vmem>>, vector<1x96xf32>
    %75 = vector.broadcast %74 : vector<1x96xf32> to vector<32x96xf32>
    %76 = arith.addf %73, %75 : vector<32x96xf32>
    %77 = vector.extract_strided_slice %76 {offsets = [0, 0], sizes = [32, 32], strides = [1, 1]} : vector<32x96xf32> to vector<32x32xf32>
    %78 = vector.shape_cast %77 : vector<32x32xf32> to vector<2x16x32xf32>
    %79 = vector.extract_strided_slice %76 {offsets = [0, 32], sizes = [32, 32], strides = [1, 1]} : vector<32x96xf32> to vector<32x32xf32>
    %80 = vector.shape_cast %79 : vector<32x32xf32> to vector<2x16x32xf32>
    %81 = vector.extract_strided_slice %76 {offsets = [0, 64], sizes = [32, 32], strides = [1, 1]} : vector<32x96xf32> to vector<32x32xf32>
    %82 = vector.shape_cast %81 : vector<32x32xf32> to vector<2x16x32xf32>
    %c0_36 = arith.constant 0 : index
    %c0_37 = arith.constant 0 : index
    %83 = vector.load %arg8[%c0_36, %c0_37] : memref<8x32xf32, #tpu.memory_space<vmem>>, vector<8x32xf32>
    %84 = vector.shape_cast %83 : vector<8x32xf32> to vector<1x8x32xf32>
    %85 = vector.shape_cast %84 : vector<1x8x32xf32> to vector<1x8x32xf32>
    %86 = vector.broadcast %85 : vector<1x8x32xf32> to vector<2x8x32xf32>
    %87 = tpu.concatenate %80, %86 in 1 : vector<2x16x32xf32>, vector<2x8x32xf32> -> vector<2x24x32xf32>
    "tpu.trace_start"() <{level = 10 : i32, message = "gid,gjd->gij"}> : () -> ()
    %cst_38 = arith.constant dense<0.000000e+00> : vector<2x24x16xf32>
    %88 = tpu.matmul %87, %78, %cst_38 {dimension_numbers = #tpu.dot_dimension_numbers<[2], [2], [1], [1], [0, 0, 0, 1, 1, 1], [0], [0]>} : vector<2x24x32xf32>, vector<2x16x32xf32>, vector<2x24x16xf32> -> vector<2x24x16xf32>
    "tpu.trace_stop"() : () -> ()
    %89 = vector.shape_cast %87 : vector<2x24x32xf32> to vector<48x32xf32>
    %c0_39 = arith.constant 0 : index
    %c0_40 = arith.constant 0 : index
    %90 = vector.load %arg9[%c0_39, %c0_40] : memref<32x8xf32, #tpu.memory_space<vmem>>, vector<32x8xf32>
    %cst_41 = arith.constant dense<0.000000e+00> : vector<48x8xf32>
    %91 = tpu.matmul %89, %90, %cst_41 {dimension_numbers = #tpu.dot_dimension_numbers<[1], [0], [0], [1], [0, 0, 1, 1], [], []>} : vector<48x32xf32>, vector<32x8xf32>, vector<48x8xf32> -> vector<48x8xf32>
    %92 = vector.shape_cast %91 : vector<48x8xf32> to vector<2x24x8xf32>
    %cst_42 = arith.constant dense<0xFF800000> : vector<2x16xf32>
    %93 = vector.multi_reduction <maximumf>, %88, %cst_42 [1] : vector<2x24x16xf32> to vector<2x16xf32>
    %94 = vector.shape_cast %93 : vector<2x16xf32> to vector<2x1x16xf32>
    %95 = vector.broadcast %94 : vector<2x1x16xf32> to vector<2x24x16xf32>
    %96 = arith.subf %88, %95 : vector<2x24x16xf32>
    %97 = math.exp %96 : vector<2x24x16xf32>
    %cst_43 = arith.constant dense<0.000000e+00> : vector<2x16xf32>
    %98 = vector.multi_reduction <add>, %97, %cst_43 [1] : vector<2x24x16xf32> to vector<2x16xf32>
    %99 = vector.shape_cast %98 : vector<2x16xf32> to vector<2x1x16xf32>
    %cst_44 = arith.constant 1.000000e+00 : f32
    %100 = vector.broadcast %cst_44 : f32 to vector<2x1x16xf32>
    %101 = arith.divf %100, %99 : vector<2x1x16xf32>
    %102 = vector.broadcast %101 : vector<2x1x16xf32> to vector<2x24x16xf32>
    %103 = arith.mulf %97, %102 : vector<2x24x16xf32>
    %cst_45 = arith.constant dense<0xFF800000> : vector<2x8xf32>
    %104 = vector.multi_reduction <maximumf>, %92, %cst_45 [1] : vector<2x24x8xf32> to vector<2x8xf32>
    %105 = vector.shape_cast %104 : vector<2x8xf32> to vector<2x1x8xf32>
    %106 = vector.broadcast %105 : vector<2x1x8xf32> to vector<2x24x8xf32>
    %107 = arith.subf %92, %106 : vector<2x24x8xf32>
    %108 = math.exp %107 : vector<2x24x8xf32>
    %cst_46 = arith.constant dense<0.000000e+00> : vector<2x8xf32>
    %109 = vector.multi_reduction <add>, %108, %cst_46 [1] : vector<2x24x8xf32> to vector<2x8xf32>
    %110 = vector.shape_cast %109 : vector<2x8xf32> to vector<2x1x8xf32>
    %cst_47 = arith.constant 1.000000e+00 : f32
    %111 = vector.broadcast %cst_47 : f32 to vector<2x1x8xf32>
    %112 = arith.divf %111, %110 : vector<2x1x8xf32>
    %113 = vector.broadcast %112 : vector<2x1x8xf32> to vector<2x24x8xf32>
    %114 = arith.mulf %108, %113 : vector<2x24x8xf32>
    "tpu.trace_start"() <{level = 10 : i32, message = "gij,gjd->gid"}> : () -> ()
    %cst_48 = arith.constant dense<0.000000e+00> : vector<2x24x32xf32>
    %115 = tpu.matmul %103, %82, %cst_48 {dimension_numbers = #tpu.dot_dimension_numbers<[2], [1], [1], [2], [0, 0, 0, 1, 1, 2], [0], [0]>} : vector<2x24x16xf32>, vector<2x16x32xf32>, vector<2x24x32xf32> -> vector<2x24x32xf32>
    "tpu.trace_stop"() : () -> ()
    %116 = vector.shape_cast %115 : vector<2x24x32xf32> to vector<48x32xf32>
    %117 = vector.shape_cast %114 : vector<2x24x8xf32> to vector<48x8xf32>
    %c0_49 = arith.constant 0 : index
    %c0_50 = arith.constant 0 : index
    %118 = vector.load %arg10[%c0_49, %c0_50] : memref<8x32xf32, #tpu.memory_space<vmem>>, vector<8x32xf32>
    %cst_51 = arith.constant dense<0.000000e+00> : vector<48x32xf32>
    %119 = tpu.matmul %117, %118, %cst_51 {dimension_numbers = #tpu.dot_dimension_numbers<[1], [0], [0], [1], [0, 0, 1, 1], [], []>} : vector<48x8xf32>, vector<8x32xf32>, vector<48x32xf32> -> vector<48x32xf32>
    %120 = arith.addf %116, %119 : vector<48x32xf32>
    %cst_52 = arith.constant dense<0.000000e+00> : vector<48xf32>
    %121 = vector.multi_reduction <add>, %120, %cst_52 [1] : vector<48x32xf32> to vector<48xf32>
    %122 = vector.shape_cast %121 : vector<48xf32> to vector<48x1xf32>
    %cst_53 = arith.constant 3.200000e+01 : f32
    %123 = vector.broadcast %cst_53 : f32 to vector<48x1xf32>
    %124 = arith.divf %122, %123 : vector<48x1xf32>
    %125 = vector.broadcast %124 : vector<48x1xf32> to vector<48x32xf32>
    %126 = arith.subf %120, %125 : vector<48x32xf32>
    %127 = arith.mulf %126, %126 : vector<48x32xf32>
    %cst_54 = arith.constant dense<0.000000e+00> : vector<48xf32>
    %128 = vector.multi_reduction <add>, %127, %cst_54 [1] : vector<48x32xf32> to vector<48xf32>
    %129 = vector.shape_cast %128 : vector<48xf32> to vector<48x1xf32>
    %cst_55 = arith.constant 3.200000e+01 : f32
    %130 = vector.broadcast %cst_55 : f32 to vector<48x1xf32>
    %131 = arith.divf %129, %130 : vector<48x1xf32>
    %132 = vector.broadcast %124 : vector<48x1xf32> to vector<48x32xf32>
    %133 = arith.subf %120, %132 : vector<48x32xf32>
    %cst_56 = arith.constant 9.99999974E-6 : f32
    %134 = vector.broadcast %cst_56 : f32 to vector<48x1xf32>
    %135 = arith.addf %131, %134 : vector<48x1xf32>
    %136 = math.rsqrt %135 : vector<48x1xf32>
    %137 = vector.broadcast %136 : vector<48x1xf32> to vector<48x32xf32>
    %138 = arith.mulf %133, %137 : vector<48x32xf32>
    %c0_57 = arith.constant 0 : index
    %c0_58 = arith.constant 0 : index
    %139 = vector.load %arg11[%c0_57, %c0_58] : memref<32x64xf32, #tpu.memory_space<vmem>>, vector<32x64xf32>
    %cst_59 = arith.constant dense<0.000000e+00> : vector<48x64xf32>
    %140 = tpu.matmul %138, %139, %cst_59 {dimension_numbers = #tpu.dot_dimension_numbers<[1], [0], [0], [1], [0, 0, 1, 1], [], []>} : vector<48x32xf32>, vector<32x64xf32>, vector<48x64xf32> -> vector<48x64xf32>
    %c0_60 = arith.constant 0 : index
    %c0_61 = arith.constant 0 : index
    %141 = vector.load %arg12[%c0_60, %c0_61] : memref<1x64xf32, #tpu.memory_space<vmem>>, vector<1x64xf32>
    %142 = vector.broadcast %141 : vector<1x64xf32> to vector<48x64xf32>
    %143 = arith.addf %140, %142 : vector<48x64xf32>
    %cst_62 = arith.constant 5.000000e-01 : f32
    %144 = vector.broadcast %cst_62 : f32 to vector<48x64xf32>
    %145 = arith.mulf %144, %143 : vector<48x64xf32>
    %cst_63 = arith.constant 0.707106769 : f32
    %146 = vector.broadcast %cst_63 : f32 to vector<48x64xf32>
    %147 = arith.mulf %143, %146 : vector<48x64xf32>
    %cst_64 = arith.constant 0.000000e+00 : f32
    %148 = vector.broadcast %cst_64 : f32 to vector<48x64xf32>
    %149 = arith.cmpf oge, %147, %148 : vector<48x64xf32>
    %cst_65 = arith.constant 1.000000e+00 : f32
    %cst_66 = arith.constant -1.000000e+00 : f32
    %150 = vector.broadcast %cst_65 : f32 to vector<48x64xf32>
    %151 = vector.broadcast %cst_66 : f32 to vector<48x64xf32>
    %152 = arith.select %149, %150, %151 : vector<48x64xi1>, vector<48x64xf32>
    %153 = math.absf %147 : vector<48x64xf32>
    %cst_67 = arith.constant 0.327591091 : f32
    %154 = vector.broadcast %cst_67 : f32 to vector<48x64xf32>
    %155 = arith.mulf %154, %153 : vector<48x64xf32>
    %cst_68 = arith.constant 1.000000e+00 : f32
    %156 = vector.broadcast %cst_68 : f32 to vector<48x64xf32>
    %157 = arith.addf %156, %155 : vector<48x64xf32>
    %cst_69 = arith.constant 1.000000e+00 : f32
    %158 = vector.broadcast %cst_69 : f32 to vector<48x64xf32>
    %159 = arith.divf %158, %157 : vector<48x64xf32>
    %cst_70 = arith.constant 1.06140542 : f32
    %160 = vector.broadcast %cst_70 : f32 to vector<48x64xf32>
    %161 = arith.mulf %160, %159 : vector<48x64xf32>
    %cst_71 = arith.constant -1.45315206 : f32
    %162 = vector.broadcast %cst_71 : f32 to vector<48x64xf32>
    %163 = arith.addf %161, %162 : vector<48x64xf32>
    %164 = arith.mulf %163, %159 : vector<48x64xf32>
    %cst_72 = arith.constant 1.42141378 : f32
    %165 = vector.broadcast %cst_72 : f32 to vector<48x64xf32>
    %166 = arith.addf %164, %165 : vector<48x64xf32>
    %167 = arith.mulf %166, %159 : vector<48x64xf32>
    %cst_73 = arith.constant -0.284496725 : f32
    %168 = vector.broadcast %cst_73 : f32 to vector<48x64xf32>
    %169 = arith.addf %167, %168 : vector<48x64xf32>
    %170 = arith.mulf %169, %159 : vector<48x64xf32>
    %cst_74 = arith.constant 0.254829586 : f32
    %171 = vector.broadcast %cst_74 : f32 to vector<48x64xf32>
    %172 = arith.addf %170, %171 : vector<48x64xf32>
    %173 = arith.mulf %172, %159 : vector<48x64xf32>
    %cst_75 = arith.constant 0.000000e+00 : f32
    %174 = vector.broadcast %cst_75 : f32 to vector<48x64xf32>
    %175 = arith.subf %174, %153 : vector<48x64xf32>
    %176 = arith.mulf %175, %153 : vector<48x64xf32>
    %177 = math.exp %176 : vector<48x64xf32>
    %178 = arith.mulf %173, %177 : vector<48x64xf32>
    %cst_76 = arith.constant 1.000000e+00 : f32
    %179 = vector.broadcast %cst_76 : f32 to vector<48x64xf32>
    %180 = arith.subf %179, %178 : vector<48x64xf32>
    %181 = arith.mulf %152, %180 : vector<48x64xf32>
    %cst_77 = arith.constant 1.000000e+00 : f32
    %182 = vector.broadcast %cst_77 : f32 to vector<48x64xf32>
    %183 = arith.addf %182, %181 : vector<48x64xf32>
    %184 = arith.mulf %145, %183 : vector<48x64xf32>
    %c0_78 = arith.constant 0 : index
    %c0_79 = arith.constant 0 : index
    %185 = vector.load %arg13[%c0_78, %c0_79] : memref<8x64xf32, #tpu.memory_space<vmem>>, vector<8x64xf32>
    %cst_80 = arith.constant dense<0.000000e+00> : vector<8x48xf32>
    %186 = tpu.matmul %185, %184, %cst_80 {dimension_numbers = #tpu.dot_dimension_numbers<[1], [1], [0], [0], [0, 0, 1, 0], [], []>} : vector<8x64xf32>, vector<48x64xf32>, vector<8x48xf32> -> vector<8x48xf32>
    %c0_81 = arith.constant 0 : index
    %c0_82 = arith.constant 0 : index
    %187 = vector.load %arg14[%c0_81, %c0_82] : memref<8x1xf32, #tpu.memory_space<vmem>>, vector<8x1xf32>
    %188 = vector.broadcast %187 : vector<8x1xf32> to vector<8x48xf32>
    %189 = arith.addf %186, %188 : vector<8x48xf32>
    %c0_83 = arith.constant 0 : index
    %c0_84 = arith.constant 0 : index
    %c0_85 = arith.constant 0 : index
    %190 = vector.load %arg15[%c0_83, %c0_84, %c0_85] : memref<1x8x48xf32, #tpu.memory_space<vmem>>, vector<1x8x48xf32>
    %191 = vector.shape_cast %190 : vector<1x8x48xf32> to vector<8x48xf32>
    %192 = vector.shape_cast %189 : vector<8x48xf32> to vector<1x8x48xf32>
    tpu.vector_store %arg15[%c0_83, %c0_84, %c0_85], %192 {strides = array<i32>} : memref<1x8x48xf32, #tpu.memory_space<vmem>>, vector<1x8x48xf32>,
    return
  }
  func.func @transform_0(%arg0: i32) -> (i32, i32, i32) {
    %c0_i32 = arith.constant 0 : i32
    %c0_i32_0 = arith.constant 0 : i32
    %c0_i32_1 = arith.constant 0 : i32
    return %arg0, %c0_i32, %c0_i32_0 : i32, i32, i32
  }
  func.func @transform_1(%arg0: i32) -> (i32, i32) {
    %c0_i32 = arith.constant 0 : i32
    %c0_i32_0 = arith.constant 0 : i32
    %c0_i32_1 = arith.constant 0 : i32
    return %c0_i32, %c0_i32_0 : i32, i32
  }
  func.func @transform_2(%arg0: i32) -> (i32, i32) {
    %c0_i32 = arith.constant 0 : i32
    %c0_i32_0 = arith.constant 0 : i32
    %c0_i32_1 = arith.constant 0 : i32
    return %c0_i32, %c0_i32_0 : i32, i32
  }
  func.func @transform_3(%arg0: i32) -> (i32, i32) {
    %c0_i32 = arith.constant 0 : i32
    %c0_i32_0 = arith.constant 0 : i32
    %c0_i32_1 = arith.constant 0 : i32
    return %c0_i32, %c0_i32_0 : i32, i32
  }
  func.func @transform_4(%arg0: i32) -> (i32, i32) {
    %c0_i32 = arith.constant 0 : i32
    %c0_i32_0 = arith.constant 0 : i32
    %c0_i32_1 = arith.constant 0 : i32
    return %c0_i32, %c0_i32_0 : i32, i32
  }
  func.func @transform_5(%arg0: i32) -> (i32, i32) {
    %c0_i32 = arith.constant 0 : i32
    %c0_i32_0 = arith.constant 0 : i32
    %c0_i32_1 = arith.constant 0 : i32
    return %c0_i32, %c0_i32_0 : i32, i32
  }
  func.func @transform_6(%arg0: i32) -> (i32, i32) {
    %c0_i32 = arith.constant 0 : i32
    %c0_i32_0 = arith.constant 0 : i32
    %c0_i32_1 = arith.constant 0 : i32
    return %c0_i32, %c0_i32_0 : i32, i32
  }
  func.func @transform_7(%arg0: i32) -> (i32, i32) {
    %c0_i32 = arith.constant 0 : i32
    %c0_i32_0 = arith.constant 0 : i32
    %c0_i32_1 = arith.constant 0 : i32
    return %c0_i32, %c0_i32_0 : i32, i32
  }
  func.func @transform_8(%arg0: i32) -> (i32, i32) {
    %c0_i32 = arith.constant 0 : i32
    %c0_i32_0 = arith.constant 0 : i32
    %c0_i32_1 = arith.constant 0 : i32
    return %c0_i32, %c0_i32_0 : i32, i32
  }
  func.func @transform_9(%arg0: i32) -> (i32, i32) {
    %c0_i32 = arith.constant 0 : i32
    %c0_i32_0 = arith.constant 0 : i32
    %c0_i32_1 = arith.constant 0 : i32
    return %c0_i32, %c0_i32_0 : i32, i32
  }
  func.func @transform_10(%arg0: i32) -> (i32, i32) {
    %c0_i32 = arith.constant 0 : i32
    %c0_i32_0 = arith.constant 0 : i32
    %c0_i32_1 = arith.constant 0 : i32
    return %c0_i32, %c0_i32_0 : i32, i32
  }
  func.func @transform_11(%arg0: i32) -> (i32, i32) {
    %c0_i32 = arith.constant 0 : i32
    %c0_i32_0 = arith.constant 0 : i32
    %c0_i32_1 = arith.constant 0 : i32
    return %c0_i32, %c0_i32_0 : i32, i32
  }
  func.func @transform_12(%arg0: i32) -> (i32, i32) {
    %c0_i32 = arith.constant 0 : i32
    %c0_i32_0 = arith.constant 0 : i32
    %c0_i32_1 = arith.constant 0 : i32
    return %c0_i32, %c0_i32_0 : i32, i32
  }
  func.func @transform_13(%arg0: i32) -> (i32, i32) {
    %c0_i32 = arith.constant 0 : i32
    %c0_i32_0 = arith.constant 0 : i32
    %c0_i32_1 = arith.constant 0 : i32
    return %c0_i32, %c0_i32_0 : i32, i32
  }
  func.func @transform_14(%arg0: i32) -> (i32, i32, i32) {
    %c0_i32 = arith.constant 0 : i32
    %c0_i32_0 = arith.constant 0 : i32
    %c0_i32_1 = arith.constant 0 : i32
    return %arg0, %c0_i32, %c0_i32_0 : i32, i32, i32
  }
}

</mosaic_0001>

<llo_original>
// kernel: point_replacer_forward.1
$region0: #{point_replacer_forward.1}
  #allocation0 [shape = 'u32[]', space=smem, size = 0x4, offset = 0x4, fixed_abs, tag = 'smem constant byte address 0x4 - core index']
  #allocation1 [shape = 'u32[144,128]{1,0:T(1,128)}', space=vmem, size = 0x12000, scoped, tag = 'internal scratch']
  %s0 = inlined_call_operand.vmem [shape: f32[4,16,3], index: 0, kind: input, shape index: {}]
  %s1 = inlined_call_operand.vmem [shape: f32[3,32], index: 1, kind: input, shape index: {}]
  %s2 = inlined_call_operand.vmem [shape: f32[1,32], index: 2, kind: input, shape index: {}]
  %s3 = inlined_call_operand.vmem [shape: f32[1,32], index: 3, kind: input, shape index: {}]
  %s4 = inlined_call_operand.vmem [shape: f32[1,32], index: 4, kind: input, shape index: {}]
  %s5 = inlined_call_operand.vmem [shape: f32[32,96], index: 5, kind: input, shape index: {}]
  %s6 = inlined_call_operand.vmem [shape: f32[1,96], index: 6, kind: input, shape index: {}]
  %s7 = inlined_call_operand.vmem [shape: f32[8,32], index: 7, kind: input, shape index: {}]
  %s8 = inlined_call_operand.vmem [shape: f32[32,8], index: 8, kind: input, shape index: {}]
  %s9 = inlined_call_operand.vmem [shape: f32[8,32], index: 9, kind: input, shape index: {}]
  %s10 = inlined_call_operand.vmem [shape: f32[32,64], index: 10, kind: input, shape index: {}]
  %s11 = inlined_call_operand.vmem [shape: f32[1,64], index: 11, kind: input, shape index: {}]
  %s12 = inlined_call_operand.vmem [shape: f32[8,64], index: 12, kind: input, shape index: {}]
  %s13 = inlined_call_operand.vmem [shape: f32[8,1], index: 13, kind: input, shape index: {}]
  %s14 = inlined_call_operand.vmem [shape: f32[2,8,48], index: 14, kind: output, shape index: {}]
  %s15 = sld [smem:[#allocation0]]
  $region89: #{point_replacer_forward.1} parent=0
    _
  %s17 = ssub.s32 1, %s15
  %s18 = scalar_select 0, %s17, %s15
  loop: start=0, step=1, limit=4
  $region2: #{point_replacer_forward.1} parent=0 // loop_pre_header
    _
  $region3: #{point_replacer_forward.1} parent=0 // loop_header
    %s20 = sphi 0, %s24
    %p21 = scmp.ge.s32.totalorder %s20, 4
    %s30 = sphi 0, %s32
    %s33 = sphi 0, %s30
    %s34 = sphi 0, %s33
    %s50 = sphi 0, %s34
    %s54 = sphi 0, %s54
    %s56 = sphi 0, %s54
    %s57 = sphi 0, %s56
    %s71 = sphi 0, %s57
    %s75 = sphi 0, %s75
    %s77 = sphi 0, %s75
    %s78 = sphi 0, %s77
    %s92 = sphi 0, %s78
    %s96 = sphi 0, %s96
    %s98 = sphi 0, %s96
    %s99 = sphi 0, %s98
    %s113 = sphi 0, %s99
    %s117 = sphi 0, %s117
    %s119 = sphi 0, %s117
    %s120 = sphi 0, %s119
    %s134 = sphi 0, %s120
    %s138 = sphi 0, %s138
    %s140 = sphi 0, %s138
    %s141 = sphi 0, %s140
    %s155 = sphi 0, %s141
    %s159 = sphi 0, %s159
    %s161 = sphi 0, %s159
    %s162 = sphi 0, %s161
    %s176 = sphi 0, %s162
    %s180 = sphi 0, %s180
    %s182 = sphi 0, %s180
    %s183 = sphi 0, %s182
    %s197 = sphi 0, %s183
    %s201 = sphi 0, %s201
    %s203 = sphi 0, %s201
    %s204 = sphi 0, %s203
    %s218 = sphi 0, %s204
    %s222 = sphi 0, %s222
    %s224 = sphi 0, %s222
    %s225 = sphi 0, %s224
    %s239 = sphi 0, %s225
    %s243 = sphi 0, %s243
    %s245 = sphi 0, %s243
    %s246 = sphi 0, %s245
    %s260 = sphi 0, %s246
    %s264 = sphi 0, %s264
    %s266 = sphi 0, %s264
    %s267 = sphi 0, %s266
    %s281 = sphi 0, %s267
    %s285 = sphi 0, %s285
    %s287 = sphi 0, %s285
    %s288 = sphi 0, %s287
    %s302 = sphi 0, %s288
    %s306 = sphi 0, %s306
    %s308 = sphi 0, %s306
    %s309 = sphi 0, %s308
    %s323 = sphi 0, %s309
    %s329 = sphi 0, %s331
    %s332 = sphi 0, %s329
    %s333 = sphi 0, %s332
    %s349 = sphi 0, %s333
  $region4: #{point_replacer_forward.1} parent=0 // loop_header_branch
    %23 = sbr.rel (%p21) target = $region8
  $region5: #{point_replacer_forward.1} parent=0 // loop_body
    %s25 = ssub.s32 %s20, 1
    %s26 = ssub.s32 %s20, 2
    %s27 = sadd.s32 %s20, 1
    %s28 = ssub.s32 %s20, %s27
    %p29 = scmp.eq.s32.totalorder %s28, 0
    %s31 = sadd.s32 %s30, 1
    %s32 = scalar_select %p29, %s30, %s31
    %p35 = pneg %p29
    %p36 = scmp.eq.s32.totalorder %s20, 1
    %p37 = por %p35, %p36
    %p38 = scmp.ne.s32.totalorder %s30, %s33
    %p39 = scmp.eq.s32.totalorder %s20, 0
    %p40 = por %p38, %p39
    %p41 = scmp.ne.s32.totalorder %s30, %s33
    %p42 = scmp.eq.s32.totalorder %s25, 1
    %p43 = por %p41, %p42
    %p44 = scmp.ne.s32.totalorder %s33, %s34
    %p45 = scmp.eq.s32.totalorder %s25, 0
    %p46 = por %p44, %p45
    %p47 = scmp.ne.s32.totalorder %s33, %s34
    %p48 = scmp.eq.s32.totalorder %s26, 1
    %p49 = por %p47, %p48
    %p51 = scmp.ne.s32.totalorder %s34, %s50
    %p52 = scmp.eq.s32.totalorder %s26, 0
    %p53 = por %p51, %p52
    %s55 = sadd.s32 %s54, 1
    %p58 = scmp.eq.s32.totalorder %s20, 1
    %p59 = scmp.ne.s32.totalorder %s54, %s56
    %p60 = scmp.eq.s32.totalorder %s20, 0
    %p61 = por %p59, %p60
    %p62 = scmp.ne.s32.totalorder %s54, %s56
    %p63 = scmp.eq.s32.totalorder %s25, 1
    %p64 = por %p62, %p63
    %p65 = scmp.ne.s32.totalorder %s56, %s57
    %p66 = scmp.eq.s32.totalorder %s25, 0
    %p67 = por %p65, %p66
    %p68 = scmp.ne.s32.totalorder %s56, %s57
    %p69 = scmp.eq.s32.totalorder %s26, 1
    %p70 = por %p68, %p69
    %p72 = scmp.ne.s32.totalorder %s57, %s71
    %p73 = scmp.eq.s32.totalorder %s26, 0
    %p74 = por %p72, %p73
    %s76 = sadd.s32 %s75, 1
    %p79 = scmp.eq.s32.totalorder %s20, 1
    %p80 = scmp.ne.s32.totalorder %s75, %s77
    %p81 = scmp.eq.s32.totalorder %s20, 0
    %p82 = por %p80, %p81
    %p83 = scmp.ne.s32.totalorder %s75, %s77
    %p84 = scmp.eq.s32.totalorder %s25, 1
    %p85 = por %p83, %p84
    %p86 = scmp.ne.s32.totalorder %s77, %s78
    %p87 = scmp.eq.s32.totalorder %s25, 0
    %p88 = por %p86, %p87
    %p89 = scmp.ne.s32.totalorder %s77, %s78
    %p90 = scmp.eq.s32.totalorder %s26, 1
    %p91 = por %p89, %p90
    %p93 = scmp.ne.s32.totalorder %s78, %s92
    %p94 = scmp.eq.s32.totalorder %s26, 0
    %p95 = por %p93, %p94
    %s97 = sadd.s32 %s96, 1
    %p100 = scmp.eq.s32.totalorder %s20, 1
    %p101 = scmp.ne.s32.totalorder %s96, %s98
    %p102 = scmp.eq.s32.totalorder %s20, 0
    %p103 = por %p101, %p102
    %p104 = scmp.ne.s32.totalorder %s96, %s98
    %p105 = scmp.eq.s32.totalorder %s25, 1
    %p106 = por %p104, %p105
    %p107 = scmp.ne.s32.totalorder %s98, %s99
    %p108 = scmp.eq.s32.totalorder %s25, 0
    %p109 = por %p107, %p108
    %p110 = scmp.ne.s32.totalorder %s98, %s99
    %p111 = scmp.eq.s32.totalorder %s26, 1
    %p112 = por %p110, %p111
    %p114 = scmp.ne.s32.totalorder %s99, %s113
    %p115 = scmp.eq.s32.totalorder %s26, 0
    %p116 = por %p114, %p115
    %s118 = sadd.s32 %s117, 1
    %p121 = scmp.eq.s32.totalorder %s20, 1
    %p122 = scmp.ne.s32.totalorder %s117, %s119
    %p123 = scmp.eq.s32.totalorder %s20, 0
    %p124 = por %p122, %p123
    %p125 = scmp.ne.s32.totalorder %s117, %s119
    %p126 = scmp.eq.s32.totalorder %s25, 1
    %p127 = por %p125, %p126
    %p128 = scmp.ne.s32.totalorder %s119, %s120
    %p129 = scmp.eq.s32.totalorder %s25, 0
    %p130 = por %p128, %p129
    %p131 = scmp.ne.s32.totalorder %s119, %s120
    %p132 = scmp.eq.s32.totalorder %s26, 1
    %p133 = por %p131, %p132
    %p135 = scmp.ne.s32.totalorder %s120, %s134
    %p136 = scmp.eq.s32.totalorder %s26, 0
    %p137 = por %p135, %p136
    %s139 = sadd.s32 %s138, 1
    %p142 = scmp.eq.s32.totalorder %s20, 1
    %p143 = scmp.ne.s32.totalorder %s138, %s140
    %p144 = scmp.eq.s32.totalorder %s20, 0
    %p145 = por %p143, %p144
    %p146 = scmp.ne.s32.totalorder %s138, %s140
    %p147 = scmp.eq.s32.totalorder %s25, 1
    %p148 = por %p146, %p147
    %p149 = scmp.ne.s32.totalorder %s140, %s141
    %p150 = scmp.eq.s32.totalorder %s25, 0
    %p151 = por %p149, %p150
    %p152 = scmp.ne.s32.totalorder %s140, %s141
    %p153 = scmp.eq.s32.totalorder %s26, 1
    %p154 = por %p152, %p153
    %p156 = scmp.ne.s32.totalorder %s141, %s155
    %p157 = scmp.eq.s32.totalorder %s26, 0
    %p158 = por %p156, %p157
    %s160 = sadd.s32 %s159, 1
    %p163 = scmp.eq.s32.totalorder %s20, 1
    %p164 = scmp.ne.s32.totalorder %s159, %s161
    %p165 = scmp.eq.s32.totalorder %s20, 0
    %p166 = por %p164, %p165
    %p167 = scmp.ne.s32.totalorder %s159, %s161
    %p168 = scmp.eq.s32.totalorder %s25, 1
    %p169 = por %p167, %p168
    %p170 = scmp.ne.s32.totalorder %s161, %s162
    %p171 = scmp.eq.s32.totalorder %s25, 0
    %p172 = por %p170, %p171
    %p173 = scmp.ne.s32.totalorder %s161, %s162
    %p174 = scmp.eq.s32.totalorder %s26, 1
    %p175 = por %p173, %p174
    %p177 = scmp.ne.s32.totalorder %s162, %s176
    %p178 = scmp.eq.s32.totalorder %s26, 0
    %p179 = por %p177, %p178
    %s181 = sadd.s32 %s180, 1
    %p184 = scmp.eq.s32.totalorder %s20, 1
    %p185 = scmp.ne.s32.totalorder %s180, %s182
    %p186 = scmp.eq.s32.totalorder %s20, 0
    %p187 = por %p185, %p186
    %p188 = scmp.ne.s32.totalorder %s180, %s182
    %p189 = scmp.eq.s32.totalorder %s25, 1
    %p190 = por %p188, %p189
    %p191 = scmp.ne.s32.totalorder %s182, %s183
    %p192 = scmp.eq.s32.totalorder %s25, 0
    %p193 = por %p191, %p192
    %p194 = scmp.ne.s32.totalorder %s182, %s183
    %p195 = scmp.eq.s32.totalorder %s26, 1
    %p196 = por %p194, %p195
    %p198 = scmp.ne.s32.totalorder %s183, %s197
    %p199 = scmp.eq.s32.totalorder %s26, 0
    %p200 = por %p198, %p199
    %s202 = sadd.s32 %s201, 1
    %p205 = scmp.eq.s32.totalorder %s20, 1
    %p206 = scmp.ne.s32.totalorder %s201, %s203
    %p207 = scmp.eq.s32.totalorder %s20, 0
    %p208 = por %p206, %p207
    %p209 = scmp.ne.s32.totalorder %s201, %s203
    %p210 = scmp.eq.s32.totalorder %s25, 1
    %p211 = por %p209, %p210
    %p212 = scmp.ne.s32.totalorder %s203, %s204
    %p213 = scmp.eq.s32.totalorder %s25, 0
    %p214 = por %p212, %p213
    %p215 = scmp.ne.s32.totalorder %s203, %s204
    %p216 = scmp.eq.s32.totalorder %s26, 1
    %p217 = por %p215, %p216
    %p219 = scmp.ne.s32.totalorder %s204, %s218
    %p220 = scmp.eq.s32.totalorder %s26, 0
    %p221 = por %p219, %p220
    %s223 = sadd.s32 %s222, 1
    %p226 = scmp.eq.s32.totalorder %s20, 1
    %p227 = scmp.ne.s32.totalorder %s222, %s224
    %p228 = scmp.eq.s32.totalorder %s20, 0
    %p229 = por %p227, %p228
    %p230 = scmp.ne.s32.totalorder %s222, %s224
    %p231 = scmp.eq.s32.totalorder %s25, 1
    %p232 = por %p230, %p231
    %p233 = scmp.ne.s32.totalorder %s224, %s225
    %p234 = scmp.eq.s32.totalorder %s25, 0
    %p235 = por %p233, %p234
    %p236 = scmp.ne.s32.totalorder %s224, %s225
    %p237 = scmp.eq.s32.totalorder %s26, 1
    %p238 = por %p236, %p237
    %p240 = scmp.ne.s32.totalorder %s225, %s239
    %p241 = scmp.eq.s32.totalorder %s26, 0
    %p242 = por %p240, %p241
    %s244 = sadd.s32 %s243, 1
    %p247 = scmp.eq.s32.totalorder %s20, 1
    %p248 = scmp.ne.s32.totalorder %s243, %s245
    %p249 = scmp.eq.s32.totalorder %s20, 0
    %p250 = por %p248, %p249
    %p251 = scmp.ne.s32.totalorder %s243, %s245
    %p252 = scmp.eq.s32.totalorder %s25, 1
    %p253 = por %p251, %p252
    %p254 = scmp.ne.s32.totalorder %s245, %s246
    %p255 = scmp.eq.s32.totalorder %s25, 0
    %p256 = por %p254, %p255
    %p257 = scmp.ne.s32.totalorder %s245, %s246
    %p258 = scmp.eq.s32.totalorder %s26, 1
    %p259 = por %p257, %p258
    %p261 = scmp.ne.s32.totalorder %s246, %s260
    %p262 = scmp.eq.s32.totalorder %s26, 0
    %p263 = por %p261, %p262
    %s265 = sadd.s32 %s264, 1
    %p268 = scmp.eq.s32.totalorder %s20, 1
    %p269 = scmp.ne.s32.totalorder %s264, %s266
    %p270 = scmp.eq.s32.totalorder %s20, 0
    %p271 = por %p269, %p270
    %p272 = scmp.ne.s32.totalorder %s264, %s266
    %p273 = scmp.eq.s32.totalorder %s25, 1
    %p274 = por %p272, %p273
    %p275 = scmp.ne.s32.totalorder %s266, %s267
    %p276 = scmp.eq.s32.totalorder %s25, 0
    %p277 = por %p275, %p276
    %p278 = scmp.ne.s32.totalorder %s266, %s267
    %p279 = scmp.eq.s32.totalorder %s26, 1
    %p280 = por %p278, %p279
    %p282 = scmp.ne.s32.totalorder %s267, %s281
    %p283 = scmp.eq.s32.totalorder %s26, 0
    %p284 = por %p282, %p283
    %s286 = sadd.s32 %s285, 1
    %p289 = scmp.eq.s32.totalorder %s20, 1
    %p290 = scmp.ne.s32.totalorder %s285, %s287
    %p291 = scmp.eq.s32.totalorder %s20, 0
    %p292 = por %p290, %p291
    %p293 = scmp.ne.s32.totalorder %s285, %s287
    %p294 = scmp.eq.s32.totalorder %s25, 1
    %p295 = por %p293, %p294
    %p296 = scmp.ne.s32.totalorder %s287, %s288
    %p297 = scmp.eq.s32.totalorder %s25, 0
    %p298 = por %p296, %p297
    %p299 = scmp.ne.s32.totalorder %s287, %s288
    %p300 = scmp.eq.s32.totalorder %s26, 1
    %p301 = por %p299, %p300
    %p303 = scmp.ne.s32.totalorder %s288, %s302
    %p304 = scmp.eq.s32.totalorder %s26, 0
    %p305 = por %p303, %p304
    %s307 = sadd.s32 %s306, 1
    %p310 = scmp.eq.s32.totalorder %s20, 1
    %p311 = scmp.ne.s32.totalorder %s306, %s308
    %p312 = scmp.eq.s32.totalorder %s20, 0
    %p313 = por %p311, %p312
    %p314 = scmp.ne.s32.totalorder %s306, %s308
    %p315 = scmp.eq.s32.totalorder %s25, 1
    %p316 = por %p314, %p315
    %p317 = scmp.ne.s32.totalorder %s308, %s309
    %p318 = scmp.eq.s32.totalorder %s25, 0
    %p319 = por %p317, %p318
    %p320 = scmp.ne.s32.totalorder %s308, %s309
    %p321 = scmp.eq.s32.totalorder %s26, 1
    %p322 = por %p320, %p321
    %p324 = scmp.ne.s32.totalorder %s309, %s323
    %p325 = scmp.eq.s32.totalorder %s26, 0
    %p326 = por %p324, %p325
    %s327 = ssub.s32 %s20, %s27
    %p328 = scmp.eq.s32.totalorder %s327, 0
    %s330 = sadd.s32 %s329, 1
    %s331 = scalar_select %p328, %s329, %s330
    %p334 = pneg %p328
    %p335 = scmp.eq.s32.totalorder %s20, 1
    %p336 = por %p334, %p335
    %p337 = scmp.ne.s32.totalorder %s329, %s332
    %p338 = scmp.eq.s32.totalorder %s20, 0
    %p339 = por %p337, %p338
    %p340 = scmp.ne.s32.totalorder %s329, %s332
    %p341 = scmp.eq.s32.totalorder %s25, 1
    %p342 = por %p340, %p341
    %p343 = scmp.ne.s32.totalorder %s332, %s333
    %p344 = scmp.eq.s32.totalorder %s25, 0
    %p345 = por %p343, %p344
    %p346 = scmp.ne.s32.totalorder %s332, %s333
    %p347 = scmp.eq.s32.totalorder %s26, 1
    %p348 = por %p346, %p347
    %p350 = scmp.ne.s32.totalorder %s333, %s349
    %p351 = scmp.eq.s32.totalorder %s26, 0
    %p352 = por %p350, %p351
    %p353 = scmp.le.s32.totalorder 1, %s20
    %p354 = scmp.lt.s32.totalorder %s20, 3
    %p355 = pnand %p353, %p354
    %p356 = pneg %p355
    // Predicated region
    $region9: #{point_replacer_forward.1} parent=5 // pred_check
      _
    $region10: #{point_replacer_forward.1} parent=5 // pred_check_branch
      %358 = sbr.rel (%p355) target = $region12
    $region11: #{point_replacer_forward.1} parent=5 // pred_region
      %s359 = ssub.s32 %s20, 1
      // Predicated region
      $region13: #{point_replacer_forward.1} parent=11 // pred_check
        %p360 = pneg %p67
      $region14: #{point_replacer_forward.1} parent=11 // pred_check_branch
        %362 = sbr.rel (%p360) target = $region16
      $region15: #{point_replacer_forward.1} parent=11 // pred_region
        _
      $region16: #{point_replacer_forward.1} parent=11 // pred_fallthru
        _
      // Predicated region
      $region17: #{point_replacer_forward.1} parent=11 // pred_check
        %p363 = pneg %p88
      $region18: #{point_replacer_forward.1} parent=11 // pred_check_branch
        %365 = sbr.rel (%p363) target = $region20
      $region19: #{point_replacer_forward.1} parent=11 // pred_region
        _
      $region20: #{point_replacer_forward.1} parent=11 // pred_fallthru
        _
      // Predicated region
      $region21: #{point_replacer_forward.1} parent=11 // pred_check
        %p366 = pneg %p109
      $region22: #{point_replacer_forward.1} parent=11 // pred_check_branch
        %368 = sbr.rel (%p366) target = $region24
      $region23: #{point_replacer_forward.1} parent=11 // pred_region
        _
      $region24: #{point_replacer_forward.1} parent=11 // pred_fallthru
        _
      // Predicated region
      $region25: #{point_replacer_forward.1} parent=11 // pred_check
        %p369 = pneg %p130
      $region26: #{point_replacer_forward.1} parent=11 // pred_check_branch
        %371 = sbr.rel (%p369) target = $region28
      $region27: #{point_replacer_forward.1} parent=11 // pred_region
        _
      $region28: #{point_replacer_forward.1} parent=11 // pred_fallthru
        _
      // Predicated region
      $region29: #{point_replacer_forward.1} parent=11 // pred_check
        %p372 = pneg %p151
      $region30: #{point_replacer_forward.1} parent=11 // pred_check_branch
        %374 = sbr.rel (%p372) target = $region32
      $region31: #{point_replacer_forward.1} parent=11 // pred_region
        _
      $region32: #{point_replacer_forward.1} parent=11 // pred_fallthru
        _
      // Predicated region
      $region33: #{point_replacer_forward.1} parent=11 // pred_check
        %p375 = pneg %p172
      $region34: #{point_replacer_forward.1} parent=11 // pred_check_branch
        %377 = sbr.rel (%p375) target = $region36
      $region35: #{point_replacer_forward.1} parent=11 // pred_region
        _
      $region36: #{point_replacer_forward.1} parent=11 // pred_fallthru
        _
      // Predicated region
      $region37: #{point_replacer_forward.1} parent=11 // pred_check
        %p378 = pneg %p193
      $region38: #{point_replacer_forward.1} parent=11 // pred_check_branch
        %380 = sbr.rel (%p378) target = $region40
      $region39: #{point_replacer_forward.1} parent=11 // pred_region
        _
      $region40: #{point_replacer_forward.1} parent=11 // pred_fallthru
        _
      // Predicated region
      $region41: #{point_replacer_forward.1} parent=11 // pred_check
        %p381 = pneg %p214
      $region42: #{point_replacer_forward.1} parent=11 // pred_check_branch
        %383 = sbr.rel (%p381) target = $region44
      $region43: #{point_replacer_forward.1} parent=11 // pred_region
        _
      $region44: #{point_replacer_forward.1} parent=11 // pred_fallthru
        _
      // Predicated region
      $region45: #{point_replacer_forward.1} parent=11 // pred_check
        %p384 = pneg %p235
      $region46: #{point_replacer_forward.1} parent=11 // pred_check_branch
        %386 = sbr.rel (%p384) target = $region48
      $region47: #{point_replacer_forward.1} parent=11 // pred_region
        _
      $region48: #{point_replacer_forward.1} parent=11 // pred_fallthru
        _
      // Predicated region
      $region49: #{point_replacer_forward.1} parent=11 // pred_check
        %p387 = pneg %p256
      $region50: #{point_replacer_forward.1} parent=11 // pred_check_branch
        %389 = sbr.rel (%p387) target = $region52
      $region51: #{point_replacer_forward.1} parent=11 // pred_region
        _
      $region52: #{point_replacer_forward.1} parent=11 // pred_fallthru
        _
      // Predicated region
      $region53: #{point_replacer_forward.1} parent=11 // pred_check
        %p390 = pneg %p277
      $region54: #{point_replacer_forward.1} parent=11 // pred_check_branch
        %392 = sbr.rel (%p390) target = $region56
      $region55: #{point_replacer_forward.1} parent=11 // pred_region
        _
      $region56: #{point_replacer_forward.1} parent=11 // pred_fallthru
        _
      // Predicated region
      $region57: #{point_replacer_forward.1} parent=11 // pred_check
        %p393 = pneg %p298
      $region58: #{point_replacer_forward.1} parent=11 // pred_check_branch
        %395 = sbr.rel (%p393) target = $region60
      $region59: #{point_replacer_forward.1} parent=11 // pred_region
        _
      $region60: #{point_replacer_forward.1} parent=11 // pred_fallthru
        _
      // Predicated region
      $region61: #{point_replacer_forward.1} parent=11 // pred_check
        %p396 = pneg %p319
      $region62: #{point_replacer_forward.1} parent=11 // pred_check_branch
        %398 = sbr.rel (%p396) target = $region64
      $region63: #{point_replacer_forward.1} parent=11 // pred_region
        _
      $region64: #{point_replacer_forward.1} parent=11 // pred_fallthru
        _
    $region12: #{point_replacer_forward.1} parent=5 // pred_fallthru
      _
    %p399 = scmp.lt.s32.totalorder %s20, 2
    // Predicated region
    $region65: #{point_replacer_forward.1} parent=5 // pred_check
      %p400 = pneg %p399
    $region66: #{point_replacer_forward.1} parent=5 // pred_check_branch
      %402 = sbr.rel (%p400) target = $region68
    $region67: #{point_replacer_forward.1} parent=5 // pred_region
      // Predicated region
      $region69: #{point_replacer_forward.1} parent=67 // pred_check
        %p403 = pneg %p40
      $region70: #{point_replacer_forward.1} parent=67 // pred_check_branch
        %405 = sbr.rel (%p403) target = $region72
      $region71: #{point_replacer_forward.1} parent=67 // pred_region
        %s406 = smul.u32 2, %s20
        %p407 = scmp.lt.s32.totalorder %s406, 3
        %s408 = scalar_select %p407, %s406, 3
        %s409 = smul.addr %s408, 2
        %s410 = smul.addr %s409, 8
        %s411 = scalar_lea.vmem %s0, %s410
        %s412 = smul.u32 2, %s20
      $region72: #{point_replacer_forward.1} parent=67 // pred_fallthru
        _
    $region68: #{point_replacer_forward.1} parent=5 // pred_fallthru
      _
    %p413 = scmp.le.s32.totalorder 1, %s20
    %p414 = scmp.lt.s32.totalorder %s20, 3
    %p415 = pnand %p413, %p414
    %p416 = pneg %p415
    // Predicated region
    $region73: #{point_replacer_forward.1} parent=5 // pred_check
      _
    $region74: #{point_replacer_forward.1} parent=5 // pred_check_branch
      %418 = sbr.rel (%p415) target = $region76
    $region75: #{point_replacer_forward.1} parent=5 // pred_region
      %s419 = ssub.s32 %s20, 1
      %s420 = smul.u32 2, %s25
      %p421 = scmp.lt.s32.totalorder %s420, 3
      %s422 = scalar_select %p421, %s420, 3
      %s423 = smul.addr %s422, 2
      %s424 = smul.addr %s423, 8
      %s425 = scalar_lea.vmem %s0, %s424
      %p426 = pneg %p46
      %p427 = pneg %p43
      %p428 = pneg %p67
      %p429 = pneg %p64
      %p430 = pneg %p88
      %p431 = pneg %p85
      %p432 = pneg %p109
      %p433 = pneg %p106
      %p434 = pneg %p130
      %p435 = pneg %p127
      %p436 = pneg %p151
      %p437 = pneg %p148
      %p438 = pneg %p172
      %p439 = pneg %p169
      %p440 = pneg %p193
      %p441 = pneg %p190
      %p442 = pneg %p214
      %p443 = pneg %p211
      %p444 = pneg %p235
      %p445 = pneg %p232
      %p446 = pneg %p256
      %p447 = pneg %p253
      %p448 = pneg %p277
      %p449 = pneg %p274
      %p450 = pneg %p298
      %p451 = pneg %p295
      %p452 = pneg %p319
      %p453 = pneg %p316
      %p454 = pneg %p345
      %p455 = pneg %p342
      %p456 = scmp.lt.s32.totalorder %s25, 1
      %s457 = scalar_select %p456, %s25, 1
      %s458 = smul.addr %s457, 8
      %s459 = scalar_lea.vmem %s14, %s458
      %s460 = smul.u32 2, %s25
      %p461 = scmp.lt.s32.totalorder %s460, 3
      %s462 = scalar_select %p461, %s460, 3
      %s463 = smul.addr %s462, 2
      %s464 = smul.addr %s463, 8
      %s465 = scalar_lea.vmem %s0, %s464
      %s466 = smul.u32 2, %s25
      %p467 = scmp.lt.s32.totalorder %s25, 1
      %s468 = scalar_select %p467, %s25, 1
      %s469 = smul.addr %s468, 8
      %s470 = scalar_lea.vmem %s14, %s469
      %v471 = vld [vmem:[%s465] sm:$0xff]
      %v472 = vld [vmem:[%s465 + $0x8] sm:$0xff]
      %v473 = vld [vmem:[%s465 + $0x10] sm:$0xff]
      %v474 = vld [vmem:[%s465 + $0x18] sm:$0xff]
      %v475 = vld [vmem:[%s1] sm:$0x7]
      %v476 = vld [vmem:[%s2] sm:$0x1]
      %v478 = vlaneseq
      %v479 = vshrl.u32 %v478, 7
      %v480 = vsub.s32 0, %v479
      %v481 = vrot.slane %v476, %v480
      %vm483 = vcmask 23552
      %v485 = vsel %vm483, %v471, 0
      %v488 = vsel %vm483, %v472, 0
      %v491 = vsel %vm483, %v473, 0
      %v494 = vsel %vm483, %v474, 0
      %vm496 = vcmask 1042432
      %v498 = vsel %vm496, %v475, 0
      %500 = vmatprep.subr.mxu0 0.0
      %501 = vmatpush1.msra.mxu0 %v498
      %502 = vmatprep.subr.mxu0 0.0
      %503 = vmatpush1.msra.mxu0 0.0
      %504 = vmatprep.subr.mxu0 0.0
      %505 = vmatpush1.msra.mxu0 0.0
      %506 = vmatprep.subr.mxu0 0.0
      %507 = vmatpush1.msra.mxu0 0.0
      %508 = vmatprep.subr.mxu0 0.0
      %509 = vmatpush1.msra.mxu0 0.0
      %510 = vmatprep.subr.mxu0 0.0
      %511 = vmatpush1.msra.mxu0 0.0
      %512 = vmatprep.subr.mxu0 0.0
      %513 = vmatpush1.msra.mxu0 0.0
      %514 = vmatprep.subr.mxu0 0.0
      %515 = vmatpush1.msra.mxu0 0.0
      %516 = vmatprep.subr.mxu0 0.0
      %517 = vmatpush1.msra.mxu0 0.0
      %518 = vmatprep.subr.mxu0 0.0
      %519 = vmatpush1.msra.mxu0 0.0
      %520 = vmatprep.subr.mxu0 0.0
      %521 = vmatpush1.msra.mxu0 0.0
      %522 = vmatprep.subr.mxu0 0.0
      %523 = vmatpush1.msra.mxu0 0.0
      %524 = vmatprep.subr.mxu0 0.0
      %525 = vmatpush1.msra.mxu0 0.0
      %526 = vmatprep.subr.mxu0 0.0
      %527 = vmatpush1.msra.mxu0 0.0
      %528 = vmatprep.subr.mxu0 0.0
      %529 = vmatpush1.msra.mxu0 0.0
      %530 = vmatprep.subr.mxu0 0.0
      %531 = vmatpush1.msra.mxu0 0.0
      %532 = vmatprep.subr.mxu0 0.0
      %533 = vmatpush1.msra.mxu0 0.0
      %534 = vmatprep.subr.mxu0 0.0
      %535 = vmatpush1.msra.mxu0 0.0
      %536 = vmatprep.subr.mxu0 0.0
      %537 = vmatpush1.msra.mxu0 0.0
      %538 = vmatprep.subr.mxu0 0.0
      %539 = vmatpush1.msra.mxu0 0.0
      %540 = vmatprep.subr.mxu0 0.0
      %541 = vmatpush1.msra.mxu0 0.0
      %542 = vmatprep.subr.mxu0 0.0
      %543 = vmatpush1.msra.mxu0 0.0
      %544 = vmatprep.subr.mxu0 0.0
      %545 = vmatpush1.msra.mxu0 0.0
      %546 = vmatprep.subr.mxu0 0.0
      %547 = vmatpush1.msra.mxu0 0.0
      %548 = vmatprep.subr.mxu0 0.0
      %549 = vmatpush1.msra.mxu0 0.0
      %550 = vmatprep.subr.mxu0 0.0
      %551 = vmatpush1.msra.mxu0 0.0
      %552 = vmatprep.subr.mxu0 0.0
      %553 = vmatpush1.msra.mxu0 0.0
      %554 = vmatprep.subr.mxu0 0.0
      %555 = vmatpush1.msra.mxu0 0.0
      %556 = vmatprep.subr.mxu0 0.0
      %557 = vmatpush1.msra.mxu0 0.0
      %558 = vmatprep.subr.mxu0 0.0
      %559 = vmatpush1.msra.mxu0 0.0
      %560 = vmatprep.subr.mxu0 0.0
      %561 = vmatpush1.msra.mxu0 0.0
      %562 = vmatprep.subr.mxu0 0.0
      %563 = vmatpush1.msra.mxu0 0.0
      %564 = vmatprep.mubr.f32.mxu0 0.0
      %565 = vmatmul.mubr.f32.gmra.mrb[0].mxu0 %v485
      %v566 = vpop.f32.mrb[0].mxu0
      %v567 = vadd.f32 %v481, %v566
      %v568 = vpop.f32.mrb[0].mxu0
      %569 = vmatprep.mubr.f32.mxu0 0.0
      %570 = vmatmul.mubr.f32.gmra.mrb[0].mxu0 %v488
      %v571 = vpop.f32.mrb[0].mxu0
      %v572 = vadd.f32 %v481, %v571
      %v573 = vpop.f32.mrb[0].mxu0
      %574 = vmatprep.mubr.f32.mxu0 0.0
      %575 = vmatmul.mubr.f32.gmra.mrb[0].mxu0 %v491
      %v576 = vpop.f32.mrb[0].mxu0
      %v577 = vadd.f32 %v481, %v576
      %v578 = vpop.f32.mrb[0].mxu0
      %579 = vmatprep.mubr.f32.mxu0 0.0
      %580 = vmatmul.mubr.f32.gmra.mrb[0].mxu0 %v494
      %v581 = vpop.f32.mrb[0].mxu0
      %v582 = vadd.f32 %v481, %v581
      %v583 = vpop.f32.mrb[0].mxu0
      %584 = vdwg.mxu0
      %v585 = vld [vmem:[%s3] sm:$0x1]
      %v586 = vld [vmem:[%s4] sm:$0x1]
      %vm587 = vcmask 261120
      %v588 = vsel %vm587, %v567, 0.0
      %589 = vadd.xlane.f32.xlu0 %v588
      %v590 = vpop.xlane.xlu0 %589
      %v591 = vsel %vm587, %v572, 0.0
      %592 = vadd.xlane.f32.xlu0 %v591
      %v593 = vpop.xlane.xlu0 %592
      %v594 = vsel %vm587, %v577, 0.0
      %595 = vadd.xlane.f32.xlu0 %v594
      %v596 = vpop.xlane.xlu0 %595
      %v597 = vsel %vm587, %v582, 0.0
      %598 = vadd.xlane.f32.xlu0 %v597
      %v599 = vpop.xlane.xlu0 %598
      %v600 = vrcp.pop 32.0
      %v601 = vmul.f32 %v590, %v600
      %v602 = vmul.f32 %v593, %v600
      %v603 = vmul.f32 %v596, %v600
      %v604 = vmul.f32 %v599, %v600
      %v605 = vsub.f32 %v567, %v601
      %v606 = vsub.f32 %v572, %v602
      %v607 = vsub.f32 %v577, %v603
      %v608 = vsub.f32 %v582, %v604
      %v609 = vmul.f32 %v605, %v605
      %v610 = vmul.f32 %v606, %v606
      %v611 = vmul.f32 %v607, %v607
      %v612 = vmul.f32 %v608, %v608
      %v613 = vsel %vm587, %v609, 0.0
      %614 = vadd.xlane.f32.xlu0 %v613
      %v615 = vpop.xlane.xlu0 %614
      %v616 = vsel %vm587, %v610, 0.0
      %617 = vadd.xlane.f32.xlu0 %v616
      %v618 = vpop.xlane.xlu0 %617
      %v619 = vsel %vm587, %v611, 0.0
      %620 = vadd.xlane.f32.xlu0 %v619
      %v621 = vpop.xlane.xlu0 %620
      %v622 = vsel %vm587, %v612, 0.0
      %623 = vadd.xlane.f32.xlu0 %v622
      %v624 = vpop.xlane.xlu0 %623
      %v625 = vmul.f32 %v615, %v600
      %v626 = vmul.f32 %v618, %v600
      %v627 = vmul.f32 %v621, %v600
      %v628 = vmul.f32 %v624, %v600
      %v629 = vadd.f32 %v625, 1e-05
      %v630 = vadd.f32 %v626, 1e-05
      %v631 = vadd.f32 %v627, 1e-05
      %v632 = vadd.f32 %v628, 1e-05
      %v633 = vrsqrt.pop %v629
      %v634 = vrsqrt.pop %v630
      %v635 = vrsqrt.pop %v631
      %v636 = vrsqrt.pop %v632
      %v637 = vmul.f32 %v605, %v633
      %v638 = vmul.f32 %v606, %v634
      %v639 = vmul.f32 %v607, %v635
      %v640 = vmul.f32 %v608, %v636
      %v642 = vlaneseq
      %v643 = vshrl.u32 %v642, 7
      %v644 = vsub.s32 0, %v643
      %v645 = vrot.slane %v585, %v644
      %v647 = vmul.f32 %v637, %v645
      %v648 = vmul.f32 %v638, %v645
      %v649 = vmul.f32 %v639, %v645
      %v650 = vmul.f32 %v640, %v645
      %v652 = vlaneseq
      %v653 = vshrl.u32 %v652, 7
      %v654 = vsub.s32 0, %v653
      %v655 = vrot.slane %v586, %v654
      %v657 = vadd.f32 %v647, %v655
      %v658 = vadd.f32 %v648, %v655
      %v659 = vadd.f32 %v649, %v655
      %v660 = vadd.f32 %v650, %v655
      %v661 = vmul.f32 %v657, 0.5
      %v662 = vmul.f32 %v658, 0.5
      %v663 = vmul.f32 %v659, 0.5
      %v664 = vmul.f32 %v660, 0.5
      %v665 = vmul.f32 %v657, 0.70710677
      %v666 = vmul.f32 %v658, 0.70710677
      %v667 = vmul.f32 %v659, 0.70710677
      %v668 = vmul.f32 %v660, 0.70710677
      %vm669 = vcmp.ge.f32.partialorder %v665, 0.0
      %vm670 = vcmp.ge.f32.partialorder %v666, 0.0
      %vm671 = vcmp.ge.f32.partialorder %v667, 0.0
      %vm672 = vcmp.ge.f32.partialorder %v668, 0.0
      %v673 = vsel %vm669, 1.0, -1.0
      %v674 = vsel %vm670, 1.0, -1.0
      %v675 = vsel %vm671, 1.0, -1.0
      %v676 = vsel %vm672, 1.0, -1.0
      %v677 = vand.u32 2147483647, %v665
      %v678 = vand.u32 2147483647, %v666
      %v679 = vand.u32 2147483647, %v667
      %v680 = vand.u32 2147483647, %v668
      %v681 = vmul.f32 %v677, 0.3275911
      %v682 = vmul.f32 %v678, 0.3275911
      %v683 = vmul.f32 %v679, 0.3275911
      %v684 = vmul.f32 %v680, 0.3275911
      %v685 = vadd.f32 %v681, 1.0
      %v686 = vadd.f32 %v682, 1.0
      %v687 = vadd.f32 %v683, 1.0
      %v688 = vadd.f32 %v684, 1.0
      %v689 = vrcp.pop %v685
      %v690 = vmul.f32 1.0, %v689
      %v691 = vrcp.pop %v686
      %v692 = vmul.f32 1.0, %v691
      %v693 = vrcp.pop %v687
      %v694 = vmul.f32 1.0, %v693
      %v695 = vrcp.pop %v688
      %v696 = vmul.f32 1.0, %v695
      %v697 = vmul.f32 %v690, 1.0614054
      %v698 = vmul.f32 %v692, 1.0614054
      %v699 = vmul.f32 %v694, 1.0614054
      %v700 = vmul.f32 %v696, 1.0614054
      %v701 = vadd.f32 %v697, -1.4531521
      %v702 = vadd.f32 %v698, -1.4531521
      %v703 = vadd.f32 %v699, -1.4531521
      %v704 = vadd.f32 %v700, -1.4531521
      %v705 = vmul.f32 %v701, %v690
      %v706 = vmul.f32 %v702, %v692
      %v707 = vmul.f32 %v703, %v694
      %v708 = vmul.f32 %v704, %v696
      %v709 = vadd.f32 %v705, 1.4214138
      %v710 = vadd.f32 %v706, 1.4214138
      %v711 = vadd.f32 %v707, 1.4214138
      %v712 = vadd.f32 %v708, 1.4214138
      %v713 = vmul.f32 %v709, %v690
      %v714 = vmul.f32 %v710, %v692
      %v715 = vmul.f32 %v711, %v694
      %v716 = vmul.f32 %v712, %v696
      %v717 = vadd.f32 %v713, -0.28449672
      %v718 = vadd.f32 %v714, -0.28449672
      %v719 = vadd.f32 %v715, -0.28449672
      %v720 = vadd.f32 %v716, -0.28449672
      %v721 = vmul.f32 %v717, %v690
      %v722 = vmul.f32 %v718, %v692
      %v723 = vmul.f32 %v719, %v694
      %v724 = vmul.f32 %v720, %v696
      %v725 = vadd.f32 %v721, 0.2548296
      %v726 = vadd.f32 %v722, 0.2548296
      %v727 = vadd.f32 %v723, 0.2548296
      %v728 = vadd.f32 %v724, 0.2548296
      %v729 = vmul.f32 %v725, %v690
      %v730 = vmul.f32 %v726, %v692
      %v731 = vmul.f32 %v727, %v694
      %v732 = vmul.f32 %v728, %v696
      %v733 = vsub.f32 0.0, %v677
      %v734 = vsub.f32 0.0, %v678
      %v735 = vsub.f32 0.0, %v679
      %v736 = vsub.f32 0.0, %v680
      %v737 = vmul.f32 %v733, %v677
      %v738 = vmul.f32 %v734, %v678
      %v739 = vmul.f32 %v735, %v679
      %v740 = vmul.f32 %v736, %v680
      %v741 = vmul.f32 %v737, 1.442695
      %v742 = vpow.pop %v741
      %v743 = vmul.f32 %v738, 1.442695
      %v744 = vpow.pop %v743
      %v745 = vmul.f32 %v739, 1.442695
      %v746 = vpow.pop %v745
      %v747 = vmul.f32 %v740, 1.442695
      %v748 = vpow.pop %v747
      %v749 = vmul.f32 %v729, %v742
      %v750 = vmul.f32 %v730, %v744
      %v751 = vmul.f32 %v731, %v746
      %v752 = vmul.f32 %v732, %v748
      %v753 = vsub.f32 1.0, %v749
      %v754 = vsub.f32 1.0, %v750
      %v755 = vsub.f32 1.0, %v751
      %v756 = vsub.f32 1.0, %v752
      %v757 = vmul.f32 %v673, %v753
      %v758 = vmul.f32 %v674, %v754
      %v759 = vmul.f32 %v675, %v755
      %v760 = vmul.f32 %v676, %v756
      %v761 = vadd.f32 %v757, 1.0
      %v762 = vadd.f32 %v758, 1.0
      %v763 = vadd.f32 %v759, 1.0
      %v764 = vadd.f32 %v760, 1.0
      %v765 = vmul.f32 %v661, %v761
      %v766 = vmul.f32 %v662, %v762
      %v767 = vmul.f32 %v663, %v763
      %v768 = vmul.f32 %v664, %v764
      %v769 = vld [vmem:[%s5] sm:$0xff]
      %v770 = vld [vmem:[%s5 + $0x8] sm:$0xff]
      %v771 = vld [vmem:[%s5 + $0x10] sm:$0xff]
      %v772 = vld [vmem:[%s5 + $0x18] sm:$0xff]
      %v773 = vld [vmem:[%s6] sm:$0x1]
      %v775 = vlaneseq
      %v776 = vshrl.u32 %v775, 7
      %v777 = vsub.s32 0, %v776
      %v778 = vrot.slane %v773, %v777
      %v781 = vsel %vm587, %v765, 0
      %v784 = vsel %vm587, %v766, 0
      %v787 = vsel %vm587, %v767, 0
      %v790 = vsel %vm587, %v768, 0
      %792 = vmatprep.subr.mxu0 0.0
      %793 = vmatpush1.msra.mxu0 %v769
      %794 = vmatprep.subr.mxu0 0.0
      %795 = vmatpush1.msra.mxu0 %v770
      %796 = vmatprep.subr.mxu0 0.0
      %797 = vmatpush1.msra.mxu0 %v771
      %798 = vmatprep.subr.mxu0 0.0
      %799 = vmatpush1.msra.mxu0 %v772
      %800 = vmatprep.subr.mxu0 0.0
      %801 = vmatpush1.msra.mxu0 0.0
      %802 = vmatprep.subr.mxu0 0.0
      %803 = vmatpush1.msra.mxu0 0.0
      %804 = vmatprep.subr.mxu0 0.0
      %805 = vmatpush1.msra.mxu0 0.0
      %806 = vmatprep.subr.mxu0 0.0
      %807 = vmatpush1.msra.mxu0 0.0
      %808 = vmatprep.subr.mxu0 0.0
      %809 = vmatpush1.msra.mxu0 0.0
      %810 = vmatprep.subr.mxu0 0.0
      %811 = vmatpush1.msra.mxu0 0.0
      %812 = vmatprep.subr.mxu0 0.0
      %813 = vmatpush1.msra.mxu0 0.0
      %814 = vmatprep.subr.mxu0 0.0
      %815 = vmatpush1.msra.mxu0 0.0
      %816 = vmatprep.subr.mxu0 0.0
      %817 = vmatpush1.msra.mxu0 0.0
      %818 = vmatprep.subr.mxu0 0.0
      %819 = vmatpush1.msra.mxu0 0.0
      %820 = vmatprep.subr.mxu0 0.0
      %821 = vmatpush1.msra.mxu0 0.0
      %822 = vmatprep.subr.mxu0 0.0
      %823 = vmatpush1.msra.mxu0 0.0
      %824 = vmatprep.subr.mxu0 0.0
      %825 = vmatpush1.msra.mxu0 0.0
      %826 = vmatprep.subr.mxu0 0.0
      %827 = vmatpush1.msra.mxu0 0.0
      %828 = vmatprep.subr.mxu0 0.0
      %829 = vmatpush1.msra.mxu0 0.0
      %830 = vmatprep.subr.mxu0 0.0
      %831 = vmatpush1.msra.mxu0 0.0
      %832 = vmatprep.subr.mxu0 0.0
      %833 = vmatpush1.msra.mxu0 0.0
      %834 = vmatprep.subr.mxu0 0.0
      %835 = vmatpush1.msra.mxu0 0.0
      %836 = vmatprep.subr.mxu0 0.0
      %837 = vmatpush1.msra.mxu0 0.0
      %838 = vmatprep.subr.mxu0 0.0
      %839 = vmatpush1.msra.mxu0 0.0
      %840 = vmatprep.subr.mxu0 0.0
      %841 = vmatpush1.msra.mxu0 0.0
      %842 = vmatprep.subr.mxu0 0.0
      %843 = vmatpush1.msra.mxu0 0.0
      %844 = vmatprep.subr.mxu0 0.0
      %845 = vmatpush1.msra.mxu0 0.0
      %846 = vmatprep.subr.mxu0 0.0
      %847 = vmatpush1.msra.mxu0 0.0
      %848 = vmatprep.subr.mxu0 0.0
      %849 = vmatpush1.msra.mxu0 0.0
      %850 = vmatprep.subr.mxu0 0.0
      %851 = vmatpush1.msra.mxu0 0.0
      %852 = vmatprep.subr.mxu0 0.0
      %853 = vmatpush1.msra.mxu0 0.0
      %854 = vmatprep.subr.mxu0 0.0
      %855 = vmatpush1.msra.mxu0 0.0
      %856 = vmatprep.mubr.f32.mxu0 0.0
      %857 = vmatmul.mubr.f32.gmra.mrb[0].mxu0 %v781
      %v858 = vpop.f32.mrb[0].mxu0
      %v859 = vadd.f32 %v778, %v858
      %v860 = vpop.f32.mrb[0].mxu0
      %861 = vmatprep.mubr.f32.mxu0 0.0
      %862 = vmatmul.mubr.f32.gmra.mrb[0].mxu0 %v784
      %v863 = vpop.f32.mrb[0].mxu0
      %v864 = vadd.f32 %v778, %v863
      %v865 = vpop.f32.mrb[0].mxu0
      %866 = vmatprep.mubr.f32.mxu0 0.0
      %867 = vmatmul.mubr.f32.gmra.mrb[0].mxu0 %v787
      %v868 = vpop.f32.mrb[0].mxu0
      %v869 = vadd.f32 %v778, %v868
      %v870 = vpop.f32.mrb[0].mxu0
      %871 = vmatprep.mubr.f32.mxu0 0.0
      %872 = vmatmul.mubr.f32.gmra.mrb[0].mxu0 %v790
      %v873 = vpop.f32.mrb[0].mxu0
      %v874 = vadd.f32 %v778, %v873
      %v875 = vpop.f32.mrb[0].mxu0
      %876 = vdwg.mxu0
      %v877 = vld [vmem:[%s7] sm:$0xff]
      %879 = vrot.lane.b32.xlu0 %v877, 32
      %v880 = vpop.permute.xlu0 %879
      %883 = vrot.lane.b32.xlu0 %v859, 96
      %v884 = vpop.permute.xlu0 %883
      %885 = vrot.lane.b32.xlu0 %v864, 96
      %v886 = vpop.permute.xlu0 %885
      %887 = vrot.lane.b32.xlu0 %v880, 96
      %v888 = vpop.permute.xlu0 %887
      %v889 = vsel %vm587, %v884, 0
      %v891 = vsel %vm587, %v886, 0
      %v893 = vsel %vm587, %v888, 0
      %v895 = vsel %vm587, %v859, 0
      %v897 = vsel %vm587, %v864, 0
      %899 = vmatprep.subr.mxu0 0.0
      %900 = vmatpush1.xpose.msra.mxu0 %v895
      %901 = vmatprep.subr.mxu0 0.0
      %902 = vmatpush1.xpose.msra.mxu0 %v897
      %903 = vmatprep.subr.mxu0 0.0
      %904 = vmatpush1.xpose.msra.mxu0 0.0
      %905 = vmatprep.subr.mxu0 0.0
      %906 = vmatpush1.xpose.msra.mxu0 0.0
      %907 = vmatprep.subr.mxu0 0.0
      %908 = vmatpush1.xpose.msra.mxu0 0.0
      %909 = vmatprep.subr.mxu0 0.0
      %910 = vmatpush1.xpose.msra.mxu0 0.0
      %911 = vmatprep.subr.mxu0 0.0
      %912 = vmatpush1.xpose.msra.mxu0 0.0
      %913 = vmatprep.subr.mxu0 0.0
      %914 = vmatpush1.xpose.msra.mxu0 0.0
      %915 = vmatprep.subr.mxu0 0.0
      %916 = vmatpush1.xpose.msra.mxu0 0.0
      %917 = vmatprep.subr.mxu0 0.0
      %918 = vmatpush1.xpose.msra.mxu0 0.0
      %919 = vmatprep.subr.mxu0 0.0
      %920 = vmatpush1.xpose.msra.mxu0 0.0
      %921 = vmatprep.subr.mxu0 0.0
      %922 = vmatpush1.xpose.msra.mxu0 0.0
      %923 = vmatprep.subr.mxu0 0.0
      %924 = vmatpush1.xpose.msra.mxu0 0.0
      %925 = vmatprep.subr.mxu0 0.0
      %926 = vmatpush1.xpose.msra.mxu0 0.0
      %927 = vmatprep.subr.mxu0 0.0
      %928 = vmatpush1.xpose.msra.mxu0 0.0
      %929 = vmatprep.subr.mxu0 0.0
      %930 = vmatpush1.xpose.msra.mxu0 0.0
      %931 = vmatprep.subr.mxu0 0.0
      %932 = vmatpush1.xpose.msra.mxu0 0.0
      %933 = vmatprep.subr.mxu0 0.0
      %934 = vmatpush1.xpose.msra.mxu0 0.0
      %935 = vmatprep.subr.mxu0 0.0
      %936 = vmatpush1.xpose.msra.mxu0 0.0
      %937 = vmatprep.subr.mxu0 0.0
      %938 = vmatpush1.xpose.msra.mxu0 0.0
      %939 = vmatprep.subr.mxu0 0.0
      %940 = vmatpush1.xpose.msra.mxu0 0.0
      %941 = vmatprep.subr.mxu0 0.0
      %942 = vmatpush1.xpose.msra.mxu0 0.0
      %943 = vmatprep.subr.mxu0 0.0
      %944 = vmatpush1.xpose.msra.mxu0 0.0
      %945 = vmatprep.subr.mxu0 0.0
      %946 = vmatpush1.xpose.msra.mxu0 0.0
      %947 = vmatprep.subr.mxu0 0.0
      %948 = vmatpush1.xpose.msra.mxu0 0.0
      %949 = vmatprep.subr.mxu0 0.0
      %950 = vmatpush1.xpose.msra.mxu0 0.0
      %951 = vmatprep.subr.mxu0 0.0
      %952 = vmatpush1.xpose.msra.mxu0 0.0
      %953 = vmatprep.subr.mxu0 0.0
      %954 = vmatpush1.xpose.msra.mxu0 0.0
      %955 = vmatprep.subr.mxu0 0.0
      %956 = vmatpush1.xpose.msra.mxu0 0.0
      %957 = vmatprep.subr.mxu0 0.0
      %958 = vmatpush1.xpose.msra.mxu0 0.0
      %959 = vmatprep.subr.mxu0 0.0
      %960 = vmatpush1.xpose.msra.mxu0 0.0
      %961 = vmatprep.subr.mxu0 0.0
      %962 = vmatpush1.xpose.msra.mxu0 0.0
      %963 = vmatprep.mubr.f32.mxu0 0.0
      %964 = vmatmul.mubr.f32.gmra.mrb[0].mxu0 %v889
      %v965 = vpop.f32.mrb[0].mxu0
      %v966 = vadd.f32 0.0, %v965
      %v967 = vpop.f32.mrb[0].mxu0
      %968 = vmatprep.mubr.f32.mxu0 0.0
      %969 = vmatmul.mubr.f32.gmra.mrb[0].mxu0 %v891
      %v970 = vpop.f32.mrb[0].mxu0
      %v971 = vadd.f32 0.0, %v970
      %v972 = vpop.f32.mrb[0].mxu0
      %973 = vmatprep.mubr.f32.mxu0 0.0
      %974 = vmatmul.mubr.f32.gmra.mrb[0].mxu0 %v893
      %v975 = vpop.f32.mrb[0].mxu0
      %v976 = vadd.f32 0.0, %v975
      %v977 = vpop.f32.mrb[0].mxu0
      %978 = vdwg.mxu0
      %981 = vrot.lane.b32.xlu0 %v869, 96
      %v982 = vpop.permute.xlu0 %981
      %983 = vrot.lane.b32.xlu0 %v874, 96
      %v984 = vpop.permute.xlu0 %983
      %v985 = vsel %vm587, %v982, 0
      %v987 = vsel %vm587, %v984, 0
      %v989 = vsel %vm587, %v869, 0
      %v991 = vsel %vm587, %v874, 0
      %993 = vmatprep.subr.mxu0 0.0
      %994 = vmatpush1.xpose.msra.mxu0 %v989
      %995 = vmatprep.subr.mxu0 0.0
      %996 = vmatpush1.xpose.msra.mxu0 %v991
      %997 = vmatprep.subr.mxu0 0.0
      %998 = vmatpush1.xpose.msra.mxu0 0.0
      %999 = vmatprep.subr.mxu0 0.0
      %1000 = vmatpush1.xpose.msra.mxu0 0.0
      %1001 = vmatprep.subr.mxu0 0.0
      %1002 = vmatpush1.xpose.msra.mxu0 0.0
      %1003 = vmatprep.subr.mxu0 0.0
      %1004 = vmatpush1.xpose.msra.mxu0 0.0
      %1005 = vmatprep.subr.mxu0 0.0
      %1006 = vmatpush1.xpose.msra.mxu0 0.0
      %1007 = vmatprep.subr.mxu0 0.0
      %1008 = vmatpush1.xpose.msra.mxu0 0.0
      %1009 = vmatprep.subr.mxu0 0.0
      %1010 = vmatpush1.xpose.msra.mxu0 0.0
      %1011 = vmatprep.subr.mxu0 0.0
      %1012 = vmatpush1.xpose.msra.mxu0 0.0
      %1013 = vmatprep.subr.mxu0 0.0
      %1014 = vmatpush1.xpose.msra.mxu0 0.0
      %1015 = vmatprep.subr.mxu0 0.0
      %1016 = vmatpush1.xpose.msra.mxu0 0.0
      %1017 = vmatprep.subr.mxu0 0.0
      %1018 = vmatpush1.xpose.msra.mxu0 0.0
      %1019 = vmatprep.subr.mxu0 0.0
      %1020 = vmatpush1.xpose.msra.mxu0 0.0
      %1021 = vmatprep.subr.mxu0 0.0
      %1022 = vmatpush1.xpose.msra.mxu0 0.0
      %1023 = vmatprep.subr.mxu0 0.0
      %1024 = vmatpush1.xpose.msra.mxu0 0.0
      %1025 = vmatprep.subr.mxu0 0.0
      %1026 = vmatpush1.xpose.msra.mxu0 0.0
      %1027 = vmatprep.subr.mxu0 0.0
      %1028 = vmatpush1.xpose.msra.mxu0 0.0
      %1029 = vmatprep.subr.mxu0 0.0
      %1030 = vmatpush1.xpose.msra.mxu0 0.0
      %1031 = vmatprep.subr.mxu0 0.0
      %1032 = vmatpush1.xpose.msra.mxu0 0.0
      %1033 = vmatprep.subr.mxu0 0.0
      %1034 = vmatpush1.xpose.msra.mxu0 0.0
      %1035 = vmatprep.subr.mxu0 0.0
      %1036 = vmatpush1.xpose.msra.mxu0 0.0
      %1037 = vmatprep.subr.mxu0 0.0
      %1038 = vmatpush1.xpose.msra.mxu0 0.0
      %1039 = vmatprep.subr.mxu0 0.0
      %1040 = vmatpush1.xpose.msra.mxu0 0.0
      %1041 = vmatprep.subr.mxu0 0.0
      %1042 = vmatpush1.xpose.msra.mxu0 0.0
      %1043 = vmatprep.subr.mxu0 0.0
      %1044 = vmatpush1.xpose.msra.mxu0 0.0
      %1045 = vmatprep.subr.mxu0 0.0
      %1046 = vmatpush1.xpose.msra.mxu0 0.0
      %1047 = vmatprep.subr.mxu0 0.0
      %1048 = vmatpush1.xpose.msra.mxu0 0.0
      %1049 = vmatprep.subr.mxu0 0.0
      %1050 = vmatpush1.xpose.msra.mxu0 0.0
      %1051 = vmatprep.subr.mxu0 0.0
      %1052 = vmatpush1.xpose.msra.mxu0 0.0
      %1053 = vmatprep.subr.mxu0 0.0
      %1054 = vmatpush1.xpose.msra.mxu0 0.0
      %1055 = vmatprep.subr.mxu0 0.0
      %1056 = vmatpush1.xpose.msra.mxu0 0.0
      %1057 = vmatprep.mubr.f32.mxu0 0.0
      %1058 = vmatmul.mubr.f32.gmra.mrb[0].mxu0 %v985
      %v1059 = vpop.f32.mrb[0].mxu0
      %v1060 = vadd.f32 0.0, %v1059
      %v1061 = vpop.f32.mrb[0].mxu0
      %1062 = vmatprep.mubr.f32.mxu0 0.0
      %1063 = vmatmul.mubr.f32.gmra.mrb[0].mxu0 %v987
      %v1064 = vpop.f32.mrb[0].mxu0
      %v1065 = vadd.f32 0.0, %v1064
      %v1066 = vpop.f32.mrb[0].mxu0
      %1067 = vmatprep.mubr.f32.mxu0 0.0
      %1068 = vmatmul.mubr.f32.gmra.mrb[0].mxu0 %v893
      %v1069 = vpop.f32.mrb[0].mxu0
      %v1070 = vadd.f32 0.0, %v1069
      %v1071 = vpop.f32.mrb[0].mxu0
      %1072 = vdwg.mxu0
      %v1073 = vld [vmem:[%s8] sm:$0xff]
      %v1074 = vld [vmem:[%s8 + $0x8] sm:$0xff]
      %v1075 = vld [vmem:[%s8 + $0x10] sm:$0xff]
      %v1076 = vld [vmem:[%s8 + $0x18] sm:$0xff]
      %1077 = vmatprep.subr.mxu0 0.0
      %1078 = vmatpush1.msra.mxu0 %v1073
      %1079 = vmatprep.subr.mxu0 0.0
      %1080 = vmatpush1.msra.mxu0 %v1074
      %1081 = vmatprep.subr.mxu0 0.0
      %1082 = vmatpush1.msra.mxu0 %v1075
      %1083 = vmatprep.subr.mxu0 0.0
      %1084 = vmatpush1.msra.mxu0 %v1076
      %1085 = vmatprep.subr.mxu0 0.0
      %1086 = vmatpush1.msra.mxu0 0.0
      %1087 = vmatprep.subr.mxu0 0.0
      %1088 = vmatpush1.msra.mxu0 0.0
      %1089 = vmatprep.subr.mxu0 0.0
      %1090 = vmatpush1.msra.mxu0 0.0
      %1091 = vmatprep.subr.mxu0 0.0
      %1092 = vmatpush1.msra.mxu0 0.0
      %1093 = vmatprep.subr.mxu0 0.0
      %1094 = vmatpush1.msra.mxu0 0.0
      %1095 = vmatprep.subr.mxu0 0.0
      %1096 = vmatpush1.msra.mxu0 0.0
      %1097 = vmatprep.subr.mxu0 0.0
      %1098 = vmatpush1.msra.mxu0 0.0
      %1099 = vmatprep.subr.mxu0 0.0
      %1100 = vmatpush1.msra.mxu0 0.0
      %1101 = vmatprep.subr.mxu0 0.0
      %1102 = vmatpush1.msra.mxu0 0.0
      %1103 = vmatprep.subr.mxu0 0.0
      %1104 = vmatpush1.msra.mxu0 0.0
      %1105 = vmatprep.subr.mxu0 0.0
      %1106 = vmatpush1.msra.mxu0 0.0
      %1107 = vmatprep.subr.mxu0 0.0
      %1108 = vmatpush1.msra.mxu0 0.0
      %1109 = vmatprep.subr.mxu0 0.0
      %1110 = vmatpush1.msra.mxu0 0.0
      %1111 = vmatprep.subr.mxu0 0.0
      %1112 = vmatpush1.msra.mxu0 0.0
      %1113 = vmatprep.subr.mxu0 0.0
      %1114 = vmatpush1.msra.mxu0 0.0
      %1115 = vmatprep.subr.mxu0 0.0
      %1116 = vmatpush1.msra.mxu0 0.0
      %1117 = vmatprep.subr.mxu0 0.0
      %1118 = vmatpush1.msra.mxu0 0.0
      %1119 = vmatprep.subr.mxu0 0.0
      %1120 = vmatpush1.msra.mxu0 0.0
      %1121 = vmatprep.subr.mxu0 0.0
      %1122 = vmatpush1.msra.mxu0 0.0
      %1123 = vmatprep.subr.mxu0 0.0
      %1124 = vmatpush1.msra.mxu0 0.0
      %1125 = vmatprep.subr.mxu0 0.0
      %1126 = vmatpush1.msra.mxu0 0.0
      %1127 = vmatprep.subr.mxu0 0.0
      %1128 = vmatpush1.msra.mxu0 0.0
      %1129 = vmatprep.subr.mxu0 0.0
      %1130 = vmatpush1.msra.mxu0 0.0
      %1131 = vmatprep.subr.mxu0 0.0
      %1132 = vmatpush1.msra.mxu0 0.0
      %1133 = vmatprep.subr.mxu0 0.0
      %1134 = vmatpush1.msra.mxu0 0.0
      %1135 = vmatprep.subr.mxu0 0.0
      %1136 = vmatpush1.msra.mxu0 0.0
      %1137 = vmatprep.subr.mxu0 0.0
      %1138 = vmatpush1.msra.mxu0 0.0
      %1139 = vmatprep.subr.mxu0 0.0
      %1140 = vmatpush1.msra.mxu0 0.0
      %1141 = vmatprep.mubr.f32.mxu0 0.0
      %1142 = vmatmul.mubr.f32.gmra.mrb[0].mxu0 %v889
      %v1143 = vpop.f32.mrb[0].mxu0
      %v1144 = vadd.f32 0.0, %v1143
      %v1145 = vpop.f32.mrb[0].mxu0
      %1146 = vmatprep.mubr.f32.mxu0 0.0
      %1147 = vmatmul.mubr.f32.gmra.mrb[0].mxu0 %v891
      %v1148 = vpop.f32.mrb[0].mxu0
      %v1149 = vadd.f32 0.0, %v1148
      %v1150 = vpop.f32.mrb[0].mxu0
      %1151 = vmatprep.mubr.f32.mxu0 0.0
      %1152 = vmatmul.mubr.f32.gmra.mrb[0].mxu0 %v893
      %v1153 = vpop.f32.mrb[0].mxu0
      %v1154 = vadd.f32 0.0, %v1153
      %v1155 = vpop.f32.mrb[0].mxu0
      %1156 = vmatprep.mubr.f32.mxu0 0.0
      %1157 = vmatmul.mubr.f32.gmra.mrb[0].mxu0 %v985
      %v1158 = vpop.f32.mrb[0].mxu0
      %v1159 = vadd.f32 0.0, %v1158
      %v1160 = vpop.f32.mrb[0].mxu0
      %1161 = vmatprep.mubr.f32.mxu0 0.0
      %1162 = vmatmul.mubr.f32.gmra.mrb[0].mxu0 %v987
      %v1163 = vpop.f32.mrb[0].mxu0
      %v1164 = vadd.f32 0.0, %v1163
      %v1165 = vpop.f32.mrb[0].mxu0
      %1166 = vmatprep.mubr.f32.mxu0 0.0
      %1167 = vmatmul.mubr.f32.gmra.mrb[0].mxu0 %v893
      %v1168 = vpop.f32.mrb[0].mxu0
      %v1169 = vadd.f32 0.0, %v1168
      %v1170 = vpop.f32.mrb[0].mxu0
      %1171 = vdwg.mxu0
      %vm1172 = vcmask 130048
      %v1173 = vsel %vm1172, %v966, -inf
      %v1174 = vsel %vm1172, %v971, -inf
      %v1175 = vsel %vm1172, %v976, -inf
      %v1176 = vmax.f32 %v1173, %v1175
      %v1177 = vmax.f32 %v1176, %v1174
      %v1178 = vrot.slane %v1177, 4
      %v1179 = vmax.f32 %v1177, %v1178
      %v1180 = vrot.slane %v1179, 2
      %v1181 = vmax.f32 %v1179, %v1180
      %v1182 = vrot.slane %v1181, 1
      %v1183 = vmax.f32 %v1181, %v1182
      %v1184 = vsel %vm1172, %v1060, -inf
      %v1185 = vsel %vm1172, %v1065, -inf
      %v1186 = vsel %vm1172, %v1070, -inf
      %v1187 = vmax.f32 %v1184, %v1186
      %v1188 = vmax.f32 %v1187, %v1185
      %v1189 = vrot.slane %v1188, 4
      %v1190 = vmax.f32 %v1188, %v1189
      %v1191 = vrot.slane %v1190, 2
      %v1192 = vmax.f32 %v1190, %v1191
      %v1193 = vrot.slane %v1192, 1
      %v1194 = vmax.f32 %v1192, %v1193
      %v1195 = vsub.f32 %v966, %v1183
      %v1196 = vsub.f32 %v971, %v1183
      %v1197 = vsub.f32 %v976, %v1183
      %v1198 = vsub.f32 %v1060, %v1194
      %v1199 = vsub.f32 %v1065, %v1194
      %v1200 = vsub.f32 %v1070, %v1194
      %v1201 = vmul.f32 %v1195, 1.442695
      %v1202 = vpow.pop %v1201
      %v1203 = vmul.f32 %v1196, 1.442695
      %v1204 = vpow.pop %v1203
      %v1205 = vmul.f32 %v1197, 1.442695
      %v1206 = vpow.pop %v1205
      %v1207 = vmul.f32 %v1198, 1.442695
      %v1208 = vpow.pop %v1207
      %v1209 = vmul.f32 %v1199, 1.442695
      %v1210 = vpow.pop %v1209
      %v1211 = vmul.f32 %v1200, 1.442695
      %v1212 = vpow.pop %v1211
      %v1213 = vsel %vm1172, %v1202, 0.0
      %v1214 = vsel %vm1172, %v1204, 0.0
      %v1215 = vadd.f32 %v1213, %v1214
      %v1216 = vsel %vm1172, %v1206, 0.0
      %v1217 = vadd.f32 %v1215, %v1216
      %v1218 = vrot.slane %v1217, 4
      %v1219 = vadd.f32 %v1217, %v1218
      %v1220 = vrot.slane %v1219, 2
      %v1221 = vadd.f32 %v1219, %v1220
      %v1222 = vrot.slane %v1221, 1
      %v1223 = vadd.f32 %v1221, %v1222
      %v1224 = vsel %vm1172, %v1208, 0.0
      %v1225 = vsel %vm1172, %v1210, 0.0
      %v1226 = vadd.f32 %v1224, %v1225
      %v1227 = vsel %vm1172, %v1212, 0.0
      %v1228 = vadd.f32 %v1226, %v1227
      %v1229 = vrot.slane %v1228, 4
      %v1230 = vadd.f32 %v1228, %v1229
      %v1231 = vrot.slane %v1230, 2
      %v1232 = vadd.f32 %v1230, %v1231
      %v1233 = vrot.slane %v1232, 1
      %v1234 = vadd.f32 %v1232, %v1233
      %v1235 = vrcp.pop %v1223
      %v1236 = vmul.f32 1.0, %v1235
      %v1237 = vrcp.pop %v1234
      %v1238 = vmul.f32 1.0, %v1237
      %v1239 = vmul.f32 %v1202, %v1236
      %v1240 = vmul.f32 %v1204, %v1236
      %v1241 = vmul.f32 %v1206, %v1236
      %v1242 = vmul.f32 %v1208, %v1238
      %v1243 = vmul.f32 %v1210, %v1238
      %v1244 = vmul.f32 %v1212, %v1238
      %vm1245 = vcmask 64512
      %v1246 = vsel %vm1245, %v1144, -inf
      %v1247 = vsel %vm1245, %v1149, -inf
      %v1248 = vsel %vm1245, %v1154, -inf
      %v1249 = vmax.f32 %v1246, %v1248
      %v1250 = vmax.f32 %v1249, %v1247
      %v1251 = vrot.slane %v1250, 4
      %v1252 = vmax.f32 %v1250, %v1251
      %v1253 = vrot.slane %v1252, 2
      %v1254 = vmax.f32 %v1252, %v1253
      %v1255 = vrot.slane %v1254, 1
      %v1256 = vmax.f32 %v1254, %v1255
      %v1257 = vsel %vm1245, %v1159, -inf
      %v1258 = vsel %vm1245, %v1164, -inf
      %v1259 = vsel %vm1245, %v1169, -inf
      %v1260 = vmax.f32 %v1257, %v1259
      %v1261 = vmax.f32 %v1260, %v1258
      %v1262 = vrot.slane %v1261, 4
      %v1263 = vmax.f32 %v1261, %v1262
      %v1264 = vrot.slane %v1263, 2
      %v1265 = vmax.f32 %v1263, %v1264
      %v1266 = vrot.slane %v1265, 1
      %v1267 = vmax.f32 %v1265, %v1266
      %v1268 = vsub.f32 %v1144, %v1256
      %v1269 = vsub.f32 %v1149, %v1256
      %v1270 = vsub.f32 %v1154, %v1256
      %v1271 = vsub.f32 %v1159, %v1267
      %v1272 = vsub.f32 %v1164, %v1267
      %v1273 = vsub.f32 %v1169, %v1267
      %v1274 = vmul.f32 %v1268, 1.442695
      %v1275 = vpow.pop %v1274
      %v1276 = vmul.f32 %v1269, 1.442695
      %v1277 = vpow.pop %v1276
      %v1278 = vmul.f32 %v1270, 1.442695
      %v1279 = vpow.pop %v1278
      %v1280 = vmul.f32 %v1271, 1.442695
      %v1281 = vpow.pop %v1280
      %v1282 = vmul.f32 %v1272, 1.442695
      %v1283 = vpow.pop %v1282
      %v1284 = vmul.f32 %v1273, 1.442695
      %v1285 = vpow.pop %v1284
      %v1286 = vsel %vm1245, %v1275, 0.0
      %v1287 = vsel %vm1245, %v1277, 0.0
      %v1288 = vadd.f32 %v1286, %v1287
      %v1289 = vsel %vm1245, %v1279, 0.0
      %v1290 = vadd.f32 %v1288, %v1289
      %v1291 = vrot.slane %v1290, 4
      %v1292 = vadd.f32 %v1290, %v1291
      %v1293 = vrot.slane %v1292, 2
      %v1294 = vadd.f32 %v1292, %v1293
      %v1295 = vrot.slane %v1294, 1
      %v1296 = vadd.f32 %v1294, %v1295
      %v1297 = vsel %vm1245, %v1281, 0.0
      %v1298 = vsel %vm1245, %v1283, 0.0
      %v1299 = vadd.f32 %v1297, %v1298
      %v1300 = vsel %vm1245, %v1285, 0.0
      %v1301 = vadd.f32 %v1299, %v1300
      %v1302 = vrot.slane %v1301, 4
      %v1303 = vadd.f32 %v1301, %v1302
      %v1304 = vrot.slane %v1303, 2
      %v1305 = vadd.f32 %v1303, %v1304
      %v1306 = vrot.slane %v1305, 1
      %v1307 = vadd.f32 %v1305, %v1306
      %v1308 = vrcp.pop %v1296
      %v1309 = vmul.f32 1.0, %v1308
      %v1310 = vrcp.pop %v1307
      %v1311 = vmul.f32 1.0, %v1310
      %v1312 = vmul.f32 %v1275, %v1309
      %v1313 = vmul.f32 %v1277, %v1309
      %v1314 = vmul.f32 %v1279, %v1309
      %v1315 = vmul.f32 %v1281, %v1311
      %v1316 = vmul.f32 %v1283, %v1311
      %v1317 = vmul.f32 %v1285, %v1311
      %1318 = vrot.lane.b32.xlu0 %v859, 64
      %v1319 = vpop.permute.xlu0 %1318
      %1320 = vrot.lane.b32.xlu0 %v864, 64
      %v1321 = vpop.permute.xlu0 %1320
      %v1325 = vsel %vm1172, %v1239, 0
      %v1328 = vsel %vm1172, %v1240, 0
      %v1331 = vsel %vm1172, %v1241, 0
      %1333 = vmatprep.subr.mxu0 0.0
      %1334 = vmatpush1.msra.mxu0 %v1319
      %1335 = vmatprep.subr.mxu0 0.0
      %1336 = vmatpush1.msra.mxu0 %v1321
      %1337 = vmatprep.subr.mxu0 0.0
      %1338 = vmatpush1.msra.mxu0 0.0
      %1339 = vmatprep.subr.mxu0 0.0
      %1340 = vmatpush1.msra.mxu0 0.0
      %1341 = vmatprep.subr.mxu0 0.0
      %1342 = vmatpush1.msra.mxu0 0.0
      %1343 = vmatprep.subr.mxu0 0.0
      %1344 = vmatpush1.msra.mxu0 0.0
      %1345 = vmatprep.subr.mxu0 0.0
      %1346 = vmatpush1.msra.mxu0 0.0
      %1347 = vmatprep.subr.mxu0 0.0
      %1348 = vmatpush1.msra.mxu0 0.0
      %1349 = vmatprep.subr.mxu0 0.0
      %1350 = vmatpush1.msra.mxu0 0.0
      %1351 = vmatprep.subr.mxu0 0.0
      %1352 = vmatpush1.msra.mxu0 0.0
      %1353 = vmatprep.subr.mxu0 0.0
      %1354 = vmatpush1.msra.mxu0 0.0
      %1355 = vmatprep.subr.mxu0 0.0
      %1356 = vmatpush1.msra.mxu0 0.0
      %1357 = vmatprep.subr.mxu0 0.0
      %1358 = vmatpush1.msra.mxu0 0.0
      %1359 = vmatprep.subr.mxu0 0.0
      %1360 = vmatpush1.msra.mxu0 0.0
      %1361 = vmatprep.subr.mxu0 0.0
      %1362 = vmatpush1.msra.mxu0 0.0
      %1363 = vmatprep.subr.mxu0 0.0
      %1364 = vmatpush1.msra.mxu0 0.0
      %1365 = vmatprep.subr.mxu0 0.0
      %1366 = vmatpush1.msra.mxu0 0.0
      %1367 = vmatprep.subr.mxu0 0.0
      %1368 = vmatpush1.msra.mxu0 0.0
      %1369 = vmatprep.subr.mxu0 0.0
      %1370 = vmatpush1.msra.mxu0 0.0
      %1371 = vmatprep.subr.mxu0 0.0
      %1372 = vmatpush1.msra.mxu0 0.0
      %1373 = vmatprep.subr.mxu0 0.0
      %1374 = vmatpush1.msra.mxu0 0.0
      %1375 = vmatprep.subr.mxu0 0.0
      %1376 = vmatpush1.msra.mxu0 0.0
      %1377 = vmatprep.subr.mxu0 0.0
      %1378 = vmatpush1.msra.mxu0 0.0
      %1379 = vmatprep.subr.mxu0 0.0
      %1380 = vmatpush1.msra.mxu0 0.0
      %1381 = vmatprep.subr.mxu0 0.0
      %1382 = vmatpush1.msra.mxu0 0.0
      %1383 = vmatprep.subr.mxu0 0.0
      %1384 = vmatpush1.msra.mxu0 0.0
      %1385 = vmatprep.subr.mxu0 0.0
      %1386 = vmatpush1.msra.mxu0 0.0
      %1387 = vmatprep.subr.mxu0 0.0
      %1388 = vmatpush1.msra.mxu0 0.0
      %1389 = vmatprep.subr.mxu0 0.0
      %1390 = vmatpush1.msra.mxu0 0.0
      %1391 = vmatprep.subr.mxu0 0.0
      %1392 = vmatpush1.msra.mxu0 0.0
      %1393 = vmatprep.subr.mxu0 0.0
      %1394 = vmatpush1.msra.mxu0 0.0
      %1395 = vmatprep.subr.mxu0 0.0
      %1396 = vmatpush1.msra.mxu0 0.0
      %1397 = vmatprep.mubr.f32.mxu0 0.0
      %1398 = vmatmul.mubr.f32.gmra.mrb[0].mxu0 %v1325
      %v1399 = vpop.f32.mrb[0].mxu0
      %v1400 = vadd.f32 0.0, %v1399
      %v1401 = vpop.f32.mrb[0].mxu0
      %1402 = vmatprep.mubr.f32.mxu0 0.0
      %1403 = vmatmul.mubr.f32.gmra.mrb[0].mxu0 %v1328
      %v1404 = vpop.f32.mrb[0].mxu0
      %v1405 = vadd.f32 0.0, %v1404
      %v1406 = vpop.f32.mrb[0].mxu0
      %1407 = vmatprep.mubr.f32.mxu0 0.0
      %1408 = vmatmul.mubr.f32.gmra.mrb[0].mxu0 %v1331
      %v1409 = vpop.f32.mrb[0].mxu0
      %v1410 = vadd.f32 0.0, %v1409
      %v1411 = vpop.f32.mrb[0].mxu0
      %1412 = vdwg.mxu0
      %1413 = vrot.lane.b32.xlu0 %v869, 64
      %v1414 = vpop.permute.xlu0 %1413
      %1415 = vrot.lane.b32.xlu0 %v874, 64
      %v1416 = vpop.permute.xlu0 %1415
      %v1420 = vsel %vm1172, %v1242, 0
      %v1423 = vsel %vm1172, %v1243, 0
      %v1426 = vsel %vm1172, %v1244, 0
      %1428 = vmatprep.subr.mxu0 0.0
      %1429 = vmatpush1.msra.mxu0 %v1414
      %1430 = vmatprep.subr.mxu0 0.0
      %1431 = vmatpush1.msra.mxu0 %v1416
      %1432 = vmatprep.subr.mxu0 0.0
      %1433 = vmatpush1.msra.mxu0 0.0
      %1434 = vmatprep.subr.mxu0 0.0
      %1435 = vmatpush1.msra.mxu0 0.0
      %1436 = vmatprep.subr.mxu0 0.0
      %1437 = vmatpush1.msra.mxu0 0.0
      %1438 = vmatprep.subr.mxu0 0.0
      %1439 = vmatpush1.msra.mxu0 0.0
      %1440 = vmatprep.subr.mxu0 0.0
      %1441 = vmatpush1.msra.mxu0 0.0
      %1442 = vmatprep.subr.mxu0 0.0
      %1443 = vmatpush1.msra.mxu0 0.0
      %1444 = vmatprep.subr.mxu0 0.0
      %1445 = vmatpush1.msra.mxu0 0.0
      %1446 = vmatprep.subr.mxu0 0.0
      %1447 = vmatpush1.msra.mxu0 0.0
      %1448 = vmatprep.subr.mxu0 0.0
      %1449 = vmatpush1.msra.mxu0 0.0
      %1450 = vmatprep.subr.mxu0 0.0
      %1451 = vmatpush1.msra.mxu0 0.0
      %1452 = vmatprep.subr.mxu0 0.0
      %1453 = vmatpush1.msra.mxu0 0.0
      %1454 = vmatprep.subr.mxu0 0.0
      %1455 = vmatpush1.msra.mxu0 0.0
      %1456 = vmatprep.subr.mxu0 0.0
      %1457 = vmatpush1.msra.mxu0 0.0
      %1458 = vmatprep.subr.mxu0 0.0
      %1459 = vmatpush1.msra.mxu0 0.0
      %1460 = vmatprep.subr.mxu0 0.0
      %1461 = vmatpush1.msra.mxu0 0.0
      %1462 = vmatprep.subr.mxu0 0.0
      %1463 = vmatpush1.msra.mxu0 0.0
      %1464 = vmatprep.subr.mxu0 0.0
      %1465 = vmatpush1.msra.mxu0 0.0
      %1466 = vmatprep.subr.mxu0 0.0
      %1467 = vmatpush1.msra.mxu0 0.0
      %1468 = vmatprep.subr.mxu0 0.0
      %1469 = vmatpush1.msra.mxu0 0.0
      %1470 = vmatprep.subr.mxu0 0.0
      %1471 = vmatpush1.msra.mxu0 0.0
      %1472 = vmatprep.subr.mxu0 0.0
      %1473 = vmatpush1.msra.mxu0 0.0
      %1474 = vmatprep.subr.mxu0 0.0
      %1475 = vmatpush1.msra.mxu0 0.0
      %1476 = vmatprep.subr.mxu0 0.0
      %1477 = vmatpush1.msra.mxu0 0.0
      %1478 = vmatprep.subr.mxu0 0.0
      %1479 = vmatpush1.msra.mxu0 0.0
      %1480 = vmatprep.subr.mxu0 0.0
      %1481 = vmatpush1.msra.mxu0 0.0
      %1482 = vmatprep.subr.mxu0 0.0
      %1483 = vmatpush1.msra.mxu0 0.0
      %1484 = vmatprep.subr.mxu0 0.0
      %1485 = vmatpush1.msra.mxu0 0.0
      %1486 = vmatprep.subr.mxu0 0.0
      %1487 = vmatpush1.msra.mxu0 0.0
      %1488 = vmatprep.subr.mxu0 0.0
      %1489 = vmatpush1.msra.mxu0 0.0
      %1490 = vmatprep.subr.mxu0 0.0
      %1491 = vmatpush1.msra.mxu0 0.0
      %1492 = vmatprep.mubr.f32.mxu0 0.0
      %1493 = vmatmul.mubr.f32.gmra.mrb[0].mxu0 %v1420
      %v1494 = vpop.f32.mrb[0].mxu0
      %v1495 = vadd.f32 0.0, %v1494
      %v1496 = vpop.f32.mrb[0].mxu0
      %1497 = vmatprep.mubr.f32.mxu0 0.0
      %1498 = vmatmul.mubr.f32.gmra.mrb[0].mxu0 %v1423
      %v1499 = vpop.f32.mrb[0].mxu0
      %v1500 = vadd.f32 0.0, %v1499
      %v1501 = vpop.f32.mrb[0].mxu0
      %1502 = vmatprep.mubr.f32.mxu0 0.0
      %1503 = vmatmul.mubr.f32.gmra.mrb[0].mxu0 %v1426
      %v1504 = vpop.f32.mrb[0].mxu0
      %v1505 = vadd.f32 0.0, %v1504
      %v1506 = vpop.f32.mrb[0].mxu0
      %1507 = vdwg.mxu0
      %v1508 = vld [vmem:[%s9] sm:$0xff]
      %v1510 = vsel %vm1245, %v1312, 0
      %v1513 = vsel %vm1245, %v1313, 0
      %v1516 = vsel %vm1245, %v1314, 0
      %v1519 = vsel %vm1245, %v1315, 0
      %v1522 = vsel %vm1245, %v1316, 0
      %v1525 = vsel %vm1245, %v1317, 0
      %1527 = vmatprep.subr.mxu0 0.0
      %1528 = vmatpush1.msra.mxu0 %v1508
      %1529 = vmatprep.subr.mxu0 0.0
      %1530 = vmatpush1.msra.mxu0 0.0
      %1531 = vmatprep.subr.mxu0 0.0
      %1532 = vmatpush1.msra.mxu0 0.0
      %1533 = vmatprep.subr.mxu0 0.0
      %1534 = vmatpush1.msra.mxu0 0.0
      %1535 = vmatprep.subr.mxu0 0.0
      %1536 = vmatpush1.msra.mxu0 0.0
      %1537 = vmatprep.subr.mxu0 0.0
      %1538 = vmatpush1.msra.mxu0 0.0
      %1539 = vmatprep.subr.mxu0 0.0
      %1540 = vmatpush1.msra.mxu0 0.0
      %1541 = vmatprep.subr.mxu0 0.0
      %1542 = vmatpush1.msra.mxu0 0.0
      %1543 = vmatprep.subr.mxu0 0.0
      %1544 = vmatpush1.msra.mxu0 0.0
      %1545 = vmatprep.subr.mxu0 0.0
      %1546 = vmatpush1.msra.mxu0 0.0
      %1547 = vmatprep.subr.mxu0 0.0
      %1548 = vmatpush1.msra.mxu0 0.0
      %1549 = vmatprep.subr.mxu0 0.0
      %1550 = vmatpush1.msra.mxu0 0.0
      %1551 = vmatprep.subr.mxu0 0.0
      %1552 = vmatpush1.msra.mxu0 0.0
      %1553 = vmatprep.subr.mxu0 0.0
      %1554 = vmatpush1.msra.mxu0 0.0
      %1555 = vmatprep.subr.mxu0 0.0
      %1556 = vmatpush1.msra.mxu0 0.0
      %1557 = vmatprep.subr.mxu0 0.0
      %1558 = vmatpush1.msra.mxu0 0.0
      %1559 = vmatprep.subr.mxu0 0.0
      %1560 = vmatpush1.msra.mxu0 0.0
      %1561 = vmatprep.subr.mxu0 0.0
      %1562 = vmatpush1.msra.mxu0 0.0
      %1563 = vmatprep.subr.mxu0 0.0
      %1564 = vmatpush1.msra.mxu0 0.0
      %1565 = vmatprep.subr.mxu0 0.0
      %1566 = vmatpush1.msra.mxu0 0.0
      %1567 = vmatprep.subr.mxu0 0.0
      %1568 = vmatpush1.msra.mxu0 0.0
      %1569 = vmatprep.subr.mxu0 0.0
      %1570 = vmatpush1.msra.mxu0 0.0
      %1571 = vmatprep.subr.mxu0 0.0
      %1572 = vmatpush1.msra.mxu0 0.0
      %1573 = vmatprep.subr.mxu0 0.0
      %1574 = vmatpush1.msra.mxu0 0.0
      %1575 = vmatprep.subr.mxu0 0.0
      %1576 = vmatpush1.msra.mxu0 0.0
      %1577 = vmatprep.subr.mxu0 0.0
      %1578 = vmatpush1.msra.mxu0 0.0
      %1579 = vmatprep.subr.mxu0 0.0
      %1580 = vmatpush1.msra.mxu0 0.0
      %1581 = vmatprep.subr.mxu0 0.0
      %1582 = vmatpush1.msra.mxu0 0.0
      %1583 = vmatprep.subr.mxu0 0.0
      %1584 = vmatpush1.msra.mxu0 0.0
      %1585 = vmatprep.subr.mxu0 0.0
      %1586 = vmatpush1.msra.mxu0 0.0
      %1587 = vmatprep.subr.mxu0 0.0
      %1588 = vmatpush1.msra.mxu0 0.0
      %1589 = vmatprep.subr.mxu0 0.0
      %1590 = vmatpush1.msra.mxu0 0.0
      %1591 = vmatprep.mubr.f32.mxu0 0.0
      %1592 = vmatmul.mubr.f32.gmra.mrb[0].mxu0 %v1510
      %v1593 = vpop.f32.mrb[0].mxu0
      %v1594 = vadd.f32 0.0, %v1593
      %v1595 = vpop.f32.mrb[0].mxu0
      %1596 = vmatprep.mubr.f32.mxu0 0.0
      %1597 = vmatmul.mubr.f32.gmra.mrb[0].mxu0 %v1513
      %v1598 = vpop.f32.mrb[0].mxu0
      %v1599 = vadd.f32 0.0, %v1598
      %v1600 = vpop.f32.mrb[0].mxu0
      %1601 = vmatprep.mubr.f32.mxu0 0.0
      %1602 = vmatmul.mubr.f32.gmra.mrb[0].mxu0 %v1516
      %v1603 = vpop.f32.mrb[0].mxu0
      %v1604 = vadd.f32 0.0, %v1603
      %v1605 = vpop.f32.mrb[0].mxu0
      %1606 = vmatprep.mubr.f32.mxu0 0.0
      %1607 = vmatmul.mubr.f32.gmra.mrb[0].mxu0 %v1519
      %v1608 = vpop.f32.mrb[0].mxu0
      %v1609 = vadd.f32 0.0, %v1608
      %v1610 = vpop.f32.mrb[0].mxu0
      %1611 = vmatprep.mubr.f32.mxu0 0.0
      %1612 = vmatmul.mubr.f32.gmra.mrb[0].mxu0 %v1522
      %v1613 = vpop.f32.mrb[0].mxu0
      %v1614 = vadd.f32 0.0, %v1613
      %v1615 = vpop.f32.mrb[0].mxu0
      %1616 = vmatprep.mubr.f32.mxu0 0.0
      %1617 = vmatmul.mubr.f32.gmra.mrb[0].mxu0 %v1525
      %v1618 = vpop.f32.mrb[0].mxu0
      %v1619 = vadd.f32 0.0, %v1618
      %v1620 = vpop.f32.mrb[0].mxu0
      %1621 = vdwg.mxu0
      %v1622 = vadd.f32 %v1400, %v1594
      %v1623 = vadd.f32 %v1405, %v1599
      %v1624 = vadd.f32 %v1410, %v1604
      %v1625 = vadd.f32 %v1495, %v1609
      %v1626 = vadd.f32 %v1500, %v1614
      %v1627 = vadd.f32 %v1505, %v1619
      %v1628 = vsel %vm587, %v1622, 0.0
      %1629 = vadd.xlane.f32.xlu0 %v1628
      %v1630 = vpop.xlane.xlu0 %1629
      %v1631 = vsel %vm587, %v1623, 0.0
      %1632 = vadd.xlane.f32.xlu0 %v1631
      %v1633 = vpop.xlane.xlu0 %1632
      %v1634 = vsel %vm587, %v1624, 0.0
      %1635 = vadd.xlane.f32.xlu0 %v1634
      %v1636 = vpop.xlane.xlu0 %1635
      %v1637 = vsel %vm587, %v1625, 0.0
      %1638 = vadd.xlane.f32.xlu0 %v1637
      %v1639 = vpop.xlane.xlu0 %1638
      %v1640 = vsel %vm587, %v1626, 0.0
      %1641 = vadd.xlane.f32.xlu0 %v1640
      %v1642 = vpop.xlane.xlu0 %1641
      %v1643 = vsel %vm587, %v1627, 0.0
      %1644 = vadd.xlane.f32.xlu0 %v1643
      %v1645 = vpop.xlane.xlu0 %1644
      %v1646 = vmul.f32 %v1630, %v600
      %v1647 = vmul.f32 %v1633, %v600
      %v1648 = vmul.f32 %v1636, %v600
      %v1649 = vmul.f32 %v1639, %v600
      %v1650 = vmul.f32 %v1642, %v600
      %v1651 = vmul.f32 %v1645, %v600
      %v1652 = vsub.f32 %v1622, %v1646
      %v1653 = vsub.f32 %v1623, %v1647
      %v1654 = vsub.f32 %v1624, %v1648
      %v1655 = vsub.f32 %v1625, %v1649
      %v1656 = vsub.f32 %v1626, %v1650
      %v1657 = vsub.f32 %v1627, %v1651
      %v1658 = vmul.f32 %v1652, %v1652
      %v1659 = vmul.f32 %v1653, %v1653
      %v1660 = vmul.f32 %v1654, %v1654
      %v1661 = vmul.f32 %v1655, %v1655
      %v1662 = vmul.f32 %v1656, %v1656
      %v1663 = vmul.f32 %v1657, %v1657
      %v1664 = vsel %vm587, %v1658, 0.0
      %1665 = vadd.xlane.f32.xlu0 %v1664
      %v1666 = vpop.xlane.xlu0 %1665
      %v1667 = vsel %vm587, %v1659, 0.0
      %1668 = vadd.xlane.f32.xlu0 %v1667
      %v1669 = vpop.xlane.xlu0 %1668
      %v1670 = vsel %vm587, %v1660, 0.0
      %1671 = vadd.xlane.f32.xlu0 %v1670
      %v1672 = vpop.xlane.xlu0 %1671
      %v1673 = vsel %vm587, %v1661, 0.0
      %1674 = vadd.xlane.f32.xlu0 %v1673
      %v1675 = vpop.xlane.xlu0 %1674
      %v1676 = vsel %vm587, %v1662, 0.0
      %1677 = vadd.xlane.f32.xlu0 %v1676
      %v1678 = vpop.xlane.xlu0 %1677
      %v1679 = vsel %vm587, %v1663, 0.0
      %1680 = vadd.xlane.f32.xlu0 %v1679
      %v1681 = vpop.xlane.xlu0 %1680
      %v1682 = vmul.f32 %v1666, %v600
      %v1683 = vmul.f32 %v1669, %v600
      %v1684 = vmul.f32 %v1672, %v600
      %v1685 = vmul.f32 %v1675, %v600
      %v1686 = vmul.f32 %v1678, %v600
      %v1687 = vmul.f32 %v1681, %v600
      %v1688 = vadd.f32 %v1682, 1e-05
      %v1689 = vadd.f32 %v1683, 1e-05
      %v1690 = vadd.f32 %v1684, 1e-05
      %v1691 = vadd.f32 %v1685, 1e-05
      %v1692 = vadd.f32 %v1686, 1e-05
      %v1693 = vadd.f32 %v1687, 1e-05
      %v1694 = vrsqrt.pop %v1688
      %v1695 = vrsqrt.pop %v1689
      %v1696 = vrsqrt.pop %v1690
      %v1697 = vrsqrt.pop %v1691
      %v1698 = vrsqrt.pop %v1692
      %v1699 = vrsqrt.pop %v1693
      %v1700 = vmul.f32 %v1652, %v1694
      %v1701 = vmul.f32 %v1653, %v1695
      %v1702 = vmul.f32 %v1654, %v1696
      %v1703 = vmul.f32 %v1655, %v1697
      %v1704 = vmul.f32 %v1656, %v1698
      %v1705 = vmul.f32 %v1657, %v1699
      %v1706 = vld [vmem:[%s10] sm:$0xff]
      %v1707 = vld [vmem:[%s10 + $0x8] sm:$0xff]
      %v1708 = vld [vmem:[%s10 + $0x10] sm:$0xff]
      %v1709 = vld [vmem:[%s10 + $0x18] sm:$0xff]
      %v1710 = vld [vmem:[%s11] sm:$0x1]
      %v1712 = vlaneseq
      %v1713 = vshrl.u32 %v1712, 7
      %v1714 = vsub.s32 0, %v1713
      %v1715 = vrot.slane %v1710, %v1714
      %v1718 = vsel %vm587, %v1700, 0
      %v1721 = vsel %vm587, %v1701, 0
      %v1724 = vsel %vm587, %v1702, 0
      %v1727 = vsel %vm587, %v1703, 0
      %v1730 = vsel %vm587, %v1704, 0
      %v1733 = vsel %vm587, %v1705, 0
      %1735 = vmatprep.subr.mxu0 0.0
      %1736 = vmatpush1.msra.mxu0 %v1706
      %1737 = vmatprep.subr.mxu0 0.0
      %1738 = vmatpush1.msra.mxu0 %v1707
      %1739 = vmatprep.subr.mxu0 0.0
      %1740 = vmatpush1.msra.mxu0 %v1708
      %1741 = vmatprep.subr.mxu0 0.0
      %1742 = vmatpush1.msra.mxu0 %v1709
      %1743 = vmatprep.subr.mxu0 0.0
      %1744 = vmatpush1.msra.mxu0 0.0
      %1745 = vmatprep.subr.mxu0 0.0
      %1746 = vmatpush1.msra.mxu0 0.0
      %1747 = vmatprep.subr.mxu0 0.0
      %1748 = vmatpush1.msra.mxu0 0.0
      %1749 = vmatprep.subr.mxu0 0.0
      %1750 = vmatpush1.msra.mxu0 0.0
      %1751 = vmatprep.subr.mxu0 0.0
      %1752 = vmatpush1.msra.mxu0 0.0
      %1753 = vmatprep.subr.mxu0 0.0
      %1754 = vmatpush1.msra.mxu0 0.0
      %1755 = vmatprep.subr.mxu0 0.0
      %1756 = vmatpush1.msra.mxu0 0.0
      %1757 = vmatprep.subr.mxu0 0.0
      %1758 = vmatpush1.msra.mxu0 0.0
      %1759 = vmatprep.subr.mxu0 0.0
      %1760 = vmatpush1.msra.mxu0 0.0
      %1761 = vmatprep.subr.mxu0 0.0
      %1762 = vmatpush1.msra.mxu0 0.0
      %1763 = vmatprep.subr.mxu0 0.0
      %1764 = vmatpush1.msra.mxu0 0.0
      %1765 = vmatprep.subr.mxu0 0.0
      %1766 = vmatpush1.msra.mxu0 0.0
      %1767 = vmatprep.subr.mxu0 0.0
      %1768 = vmatpush1.msra.mxu0 0.0
      %1769 = vmatprep.subr.mxu0 0.0
      %1770 = vmatpush1.msra.mxu0 0.0
      %1771 = vmatprep.subr.mxu0 0.0
      %1772 = vmatpush1.msra.mxu0 0.0
      %1773 = vmatprep.subr.mxu0 0.0
      %1774 = vmatpush1.msra.mxu0 0.0
      %1775 = vmatprep.subr.mxu0 0.0
      %1776 = vmatpush1.msra.mxu0 0.0
      %1777 = vmatprep.subr.mxu0 0.0
      %1778 = vmatpush1.msra.mxu0 0.0
      %1779 = vmatprep.subr.mxu0 0.0
      %1780 = vmatpush1.msra.mxu0 0.0
      %1781 = vmatprep.subr.mxu0 0.0
      %1782 = vmatpush1.msra.mxu0 0.0
      %1783 = vmatprep.subr.mxu0 0.0
      %1784 = vmatpush1.msra.mxu0 0.0
      %1785 = vmatprep.subr.mxu0 0.0
      %1786 = vmatpush1.msra.mxu0 0.0
      %1787 = vmatprep.subr.mxu0 0.0
      %1788 = vmatpush1.msra.mxu0 0.0
      %1789 = vmatprep.subr.mxu0 0.0
      %1790 = vmatpush1.msra.mxu0 0.0
      %1791 = vmatprep.subr.mxu0 0.0
      %1792 = vmatpush1.msra.mxu0 0.0
      %1793 = vmatprep.subr.mxu0 0.0
      %1794 = vmatpush1.msra.mxu0 0.0
      %1795 = vmatprep.subr.mxu0 0.0
      %1796 = vmatpush1.msra.mxu0 0.0
      %1797 = vmatprep.subr.mxu0 0.0
      %1798 = vmatpush1.msra.mxu0 0.0
      %1799 = vmatprep.mubr.f32.mxu0 0.0
      %1800 = vmatmul.mubr.f32.gmra.mrb[0].mxu0 %v1718
      %v1801 = vpop.f32.mrb[0].mxu0
      %v1802 = vadd.f32 %v1715, %v1801
      %v1803 = vpop.f32.mrb[0].mxu0
      %1804 = vmatprep.mubr.f32.mxu0 0.0
      %1805 = vmatmul.mubr.f32.gmra.mrb[0].mxu0 %v1721
      %v1806 = vpop.f32.mrb[0].mxu0
      %v1807 = vadd.f32 %v1715, %v1806
      %v1808 = vpop.f32.mrb[0].mxu0
      %1809 = vmatprep.mubr.f32.mxu0 0.0
      %1810 = vmatmul.mubr.f32.gmra.mrb[0].mxu0 %v1724
      %v1811 = vpop.f32.mrb[0].mxu0
      %v1812 = vadd.f32 %v1715, %v1811
      %v1813 = vpop.f32.mrb[0].mxu0
      %1814 = vmatprep.mubr.f32.mxu0 0.0
      %1815 = vmatmul.mubr.f32.gmra.mrb[0].mxu0 %v1727
      %v1816 = vpop.f32.mrb[0].mxu0
      %v1817 = vadd.f32 %v1715, %v1816
      %v1818 = vpop.f32.mrb[0].mxu0
      %1819 = vmatprep.mubr.f32.mxu0 0.0
      %1820 = vmatmul.mubr.f32.gmra.mrb[0].mxu0 %v1730
      %v1821 = vpop.f32.mrb[0].mxu0
      %v1822 = vadd.f32 %v1715, %v1821
      %v1823 = vpop.f32.mrb[0].mxu0
      %1824 = vmatprep.mubr.f32.mxu0 0.0
      %1825 = vmatmul.mubr.f32.gmra.mrb[0].mxu0 %v1733
      %v1826 = vpop.f32.mrb[0].mxu0
      %v1827 = vadd.f32 %v1715, %v1826
      %v1828 = vpop.f32.mrb[0].mxu0
      %1829 = vdwg.mxu0
      %v1830 = vmul.f32 %v1802, 0.5
      %v1831 = vmul.f32 %v1807, 0.5
      %v1832 = vmul.f32 %v1812, 0.5
      %v1833 = vmul.f32 %v1817, 0.5
      %v1834 = vmul.f32 %v1822, 0.5
      %v1835 = vmul.f32 %v1827, 0.5
      %v1836 = vmul.f32 %v1802, 0.70710677
      %v1837 = vmul.f32 %v1807, 0.70710677
      %v1838 = vmul.f32 %v1812, 0.70710677
      %v1839 = vmul.f32 %v1817, 0.70710677
      %v1840 = vmul.f32 %v1822, 0.70710677
      %v1841 = vmul.f32 %v1827, 0.70710677
      %vm1842 = vcmp.ge.f32.partialorder %v1836, 0.0
      %vm1843 = vcmp.ge.f32.partialorder %v1837, 0.0
      %vm1844 = vcmp.ge.f32.partialorder %v1838, 0.0
      %vm1845 = vcmp.ge.f32.partialorder %v1839, 0.0
      %vm1846 = vcmp.ge.f32.partialorder %v1840, 0.0
      %vm1847 = vcmp.ge.f32.partialorder %v1841, 0.0
      %v1848 = vsel %vm1842, 1.0, -1.0
      %v1849 = vsel %vm1843, 1.0, -1.0
      %v1850 = vsel %vm1844, 1.0, -1.0
      %v1851 = vsel %vm1845, 1.0, -1.0
      %v1852 = vsel %vm1846, 1.0, -1.0
      %v1853 = vsel %vm1847, 1.0, -1.0
      %v1854 = vand.u32 2147483647, %v1836
      %v1855 = vand.u32 2147483647, %v1837
      %v1856 = vand.u32 2147483647, %v1838
      %v1857 = vand.u32 2147483647, %v1839
      %v1858 = vand.u32 2147483647, %v1840
      %v1859 = vand.u32 2147483647, %v1841
      %v1860 = vmul.f32 %v1854, 0.3275911
      %v1861 = vmul.f32 %v1855, 0.3275911
      %v1862 = vmul.f32 %v1856, 0.3275911
      %v1863 = vmul.f32 %v1857, 0.3275911
      %v1864 = vmul.f32 %v1858, 0.3275911
      %v1865 = vmul.f32 %v1859, 0.3275911
      %v1866 = vadd.f32 %v1860, 1.0
      %v1867 = vadd.f32 %v1861, 1.0
      %v1868 = vadd.f32 %v1862, 1.0
      %v1869 = vadd.f32 %v1863, 1.0
      %v1870 = vadd.f32 %v1864, 1.0
      %v1871 = vadd.f32 %v1865, 1.0
      %v1872 = vrcp.pop %v1866
      %v1873 = vmul.f32 1.0, %v1872
      %v1874 = vrcp.pop %v1867
      %v1875 = vmul.f32 1.0, %v1874
      %v1876 = vrcp.pop %v1868
      %v1877 = vmul.f32 1.0, %v1876
      %v1878 = vrcp.pop %v1869
      %v1879 = vmul.f32 1.0, %v1878
      %v1880 = vrcp.pop %v1870
      %v1881 = vmul.f32 1.0, %v1880
      %v1882 = vrcp.pop %v1871
      %v1883 = vmul.f32 1.0, %v1882
      %v1884 = vmul.f32 %v1873, 1.0614054
      %v1885 = vmul.f32 %v1875, 1.0614054
      %v1886 = vmul.f32 %v1877, 1.0614054
      %v1887 = vmul.f32 %v1879, 1.0614054
      %v1888 = vmul.f32 %v1881, 1.0614054
      %v1889 = vmul.f32 %v1883, 1.0614054
      %v1890 = vadd.f32 %v1884, -1.4531521
      %v1891 = vadd.f32 %v1885, -1.4531521
      %v1892 = vadd.f32 %v1886, -1.4531521
      %v1893 = vadd.f32 %v1887, -1.4531521
      %v1894 = vadd.f32 %v1888, -1.4531521
      %v1895 = vadd.f32 %v1889, -1.4531521
      %v1896 = vmul.f32 %v1890, %v1873
      %v1897 = vmul.f32 %v1891, %v1875
      %v1898 = vmul.f32 %v1892, %v1877
      %v1899 = vmul.f32 %v1893, %v1879
      %v1900 = vmul.f32 %v1894, %v1881
      %v1901 = vmul.f32 %v1895, %v1883
      %v1902 = vadd.f32 %v1896, 1.4214138
      %v1903 = vadd.f32 %v1897, 1.4214138
      %v1904 = vadd.f32 %v1898, 1.4214138
      %v1905 = vadd.f32 %v1899, 1.4214138
      %v1906 = vadd.f32 %v1900, 1.4214138
      %v1907 = vadd.f32 %v1901, 1.4214138
      %v1908 = vmul.f32 %v1902, %v1873
      %v1909 = vmul.f32 %v1903, %v1875
      %v1910 = vmul.f32 %v1904, %v1877
      %v1911 = vmul.f32 %v1905, %v1879
      %v1912 = vmul.f32 %v1906, %v1881
      %v1913 = vmul.f32 %v1907, %v1883
      %v1914 = vadd.f32 %v1908, -0.28449672
      %v1915 = vadd.f32 %v1909, -0.28449672
      %v1916 = vadd.f32 %v1910, -0.28449672
      %v1917 = vadd.f32 %v1911, -0.28449672
      %v1918 = vadd.f32 %v1912, -0.28449672
      %v1919 = vadd.f32 %v1913, -0.28449672
      %v1920 = vmul.f32 %v1914, %v1873
      %v1921 = vmul.f32 %v1915, %v1875
      %v1922 = vmul.f32 %v1916, %v1877
      %v1923 = vmul.f32 %v1917, %v1879
      %v1924 = vmul.f32 %v1918, %v1881
      %v1925 = vmul.f32 %v1919, %v1883
      %v1926 = vadd.f32 %v1920, 0.2548296
      %v1927 = vadd.f32 %v1921, 0.2548296
      %v1928 = vadd.f32 %v1922, 0.2548296
      %v1929 = vadd.f32 %v1923, 0.2548296
      %v1930 = vadd.f32 %v1924, 0.2548296
      %v1931 = vadd.f32 %v1925, 0.2548296
      %v1932 = vmul.f32 %v1926, %v1873
      %v1933 = vmul.f32 %v1927, %v1875
      %v1934 = vmul.f32 %v1928, %v1877
      %v1935 = vmul.f32 %v1929, %v1879
      %v1936 = vmul.f32 %v1930, %v1881
      %v1937 = vmul.f32 %v1931, %v1883
      %v1938 = vsub.f32 0.0, %v1854
      %v1939 = vsub.f32 0.0, %v1855
      %v1940 = vsub.f32 0.0, %v1856
      %v1941 = vsub.f32 0.0, %v1857
      %v1942 = vsub.f32 0.0, %v1858
      %v1943 = vsub.f32 0.0, %v1859
      %v1944 = vmul.f32 %v1938, %v1854
      %v1945 = vmul.f32 %v1939, %v1855
      %v1946 = vmul.f32 %v1940, %v1856
      %v1947 = vmul.f32 %v1941, %v1857
      %v1948 = vmul.f32 %v1942, %v1858
      %v1949 = vmul.f32 %v1943, %v1859
      %v1950 = vmul.f32 %v1944, 1.442695
      %v1951 = vpow.pop %v1950
      %v1952 = vmul.f32 %v1945, 1.442695
      %v1953 = vpow.pop %v1952
      %v1954 = vmul.f32 %v1946, 1.442695
      %v1955 = vpow.pop %v1954
      %v1956 = vmul.f32 %v1947, 1.442695
      %v1957 = vpow.pop %v1956
      %v1958 = vmul.f32 %v1948, 1.442695
      %v1959 = vpow.pop %v1958
      %v1960 = vmul.f32 %v1949, 1.442695
      %v1961 = vpow.pop %v1960
      %v1962 = vmul.f32 %v1932, %v1951
      %v1963 = vmul.f32 %v1933, %v1953
      %v1964 = vmul.f32 %v1934, %v1955
      %v1965 = vmul.f32 %v1935, %v1957
      %v1966 = vmul.f32 %v1936, %v1959
      %v1967 = vmul.f32 %v1937, %v1961
      %v1968 = vsub.f32 1.0, %v1962
      %v1969 = vsub.f32 1.0, %v1963
      %v1970 = vsub.f32 1.0, %v1964
      %v1971 = vsub.f32 1.0, %v1965
      %v1972 = vsub.f32 1.0, %v1966
      %v1973 = vsub.f32 1.0, %v1967
      %v1974 = vmul.f32 %v1848, %v1968
      %v1975 = vmul.f32 %v1849, %v1969
      %v1976 = vmul.f32 %v1850, %v1970
      %v1977 = vmul.f32 %v1851, %v1971
      %v1978 = vmul.f32 %v1852, %v1972
      %v1979 = vmul.f32 %v1853, %v1973
      %v1980 = vadd.f32 %v1974, 1.0
      %v1981 = vadd.f32 %v1975, 1.0
      %v1982 = vadd.f32 %v1976, 1.0
      %v1983 = vadd.f32 %v1977, 1.0
      %v1984 = vadd.f32 %v1978, 1.0
      %v1985 = vadd.f32 %v1979, 1.0
      %v1986 = vmul.f32 %v1830, %v1980
      %v1987 = vmul.f32 %v1831, %v1981
      %v1988 = vmul.f32 %v1832, %v1982
      %v1989 = vmul.f32 %v1833, %v1983
      %v1990 = vmul.f32 %v1834, %v1984
      %v1991 = vmul.f32 %v1835, %v1985
      %v1992 = vld [vmem:[%s12] sm:$0xff]
      %v1993 = vld [vmem:[%s13] sm:$0xff]
      %1995 = vset.pattern.permute.xlu0 0
      %1996 = vperm.xlu0 %1995, %v1993
      %v1997 = vpop.permute.xlu0 %1996
      %vm1999 = vcmask 523264
      %v2001 = vsel %vm1999, %v1992, 0
      %v2004 = vsel %vm1999, %v1986, 0
      %v2007 = vsel %vm1999, %v1987, 0
      %v2010 = vsel %vm1999, %v1988, 0
      %v2013 = vsel %vm1999, %v1989, 0
      %v2016 = vsel %vm1999, %v1990, 0
      %v2019 = vsel %vm1999, %v1991, 0
      %2021 = vmatprep.subr.mxu0 0.0
      %2022 = vmatpush1.xpose.msra.mxu0 %v2004
      %2023 = vmatprep.subr.mxu0 0.0
      %2024 = vmatpush1.xpose.msra.mxu0 %v2007
      %2025 = vmatprep.subr.mxu0 0.0
      %2026 = vmatpush1.xpose.msra.mxu0 %v2010
      %2027 = vmatprep.subr.mxu0 0.0
      %2028 = vmatpush1.xpose.msra.mxu0 %v2013
      %2029 = vmatprep.subr.mxu0 0.0
      %2030 = vmatpush1.xpose.msra.mxu0 %v2016
      %2031 = vmatprep.subr.mxu0 0.0
      %2032 = vmatpush1.xpose.msra.mxu0 %v2019
      %2033 = vmatprep.subr.mxu0 0.0
      %2034 = vmatpush1.xpose.msra.mxu0 0.0
      %2035 = vmatprep.subr.mxu0 0.0
      %2036 = vmatpush1.xpose.msra.mxu0 0.0
      %2037 = vmatprep.subr.mxu0 0.0
      %2038 = vmatpush1.xpose.msra.mxu0 0.0
      %2039 = vmatprep.subr.mxu0 0.0
      %2040 = vmatpush1.xpose.msra.mxu0 0.0
      %2041 = vmatprep.subr.mxu0 0.0
      %2042 = vmatpush1.xpose.msra.mxu0 0.0
      %2043 = vmatprep.subr.mxu0 0.0
      %2044 = vmatpush1.xpose.msra.mxu0 0.0
      %2045 = vmatprep.subr.mxu0 0.0
      %2046 = vmatpush1.xpose.msra.mxu0 0.0
      %2047 = vmatprep.subr.mxu0 0.0
      %2048 = vmatpush1.xpose.msra.mxu0 0.0
      %2049 = vmatprep.subr.mxu0 0.0
      %2050 = vmatpush1.xpose.msra.mxu0 0.0
      %2051 = vmatprep.subr.mxu0 0.0
      %2052 = vmatpush1.xpose.msra.mxu0 0.0
      %2053 = vmatprep.subr.mxu0 0.0
      %2054 = vmatpush1.xpose.msra.mxu0 0.0
      %2055 = vmatprep.subr.mxu0 0.0
      %2056 = vmatpush1.xpose.msra.mxu0 0.0
      %2057 = vmatprep.subr.mxu0 0.0
      %2058 = vmatpush1.xpose.msra.mxu0 0.0
      %2059 = vmatprep.subr.mxu0 0.0
      %2060 = vmatpush1.xpose.msra.mxu0 0.0
      %2061 = vmatprep.subr.mxu0 0.0
      %2062 = vmatpush1.xpose.msra.mxu0 0.0
      %2063 = vmatprep.subr.mxu0 0.0
      %2064 = vmatpush1.xpose.msra.mxu0 0.0
      %2065 = vmatprep.subr.mxu0 0.0
      %2066 = vmatpush1.xpose.msra.mxu0 0.0
      %2067 = vmatprep.subr.mxu0 0.0
      %2068 = vmatpush1.xpose.msra.mxu0 0.0
      %2069 = vmatprep.subr.mxu0 0.0
      %2070 = vmatpush1.xpose.msra.mxu0 0.0
      %2071 = vmatprep.subr.mxu0 0.0
      %2072 = vmatpush1.xpose.msra.mxu0 0.0
      %2073 = vmatprep.subr.mxu0 0.0
      %2074 = vmatpush1.xpose.msra.mxu0 0.0
      %2075 = vmatprep.subr.mxu0 0.0
      %2076 = vmatpush1.xpose.msra.mxu0 0.0
      %2077 = vmatprep.subr.mxu0 0.0
      %2078 = vmatpush1.xpose.msra.mxu0 0.0
      %2079 = vmatprep.subr.mxu0 0.0
      %2080 = vmatpush1.xpose.msra.mxu0 0.0
      %2081 = vmatprep.subr.mxu0 0.0
      %2082 = vmatpush1.xpose.msra.mxu0 0.0
      %2083 = vmatprep.subr.mxu0 0.0
      %2084 = vmatpush1.xpose.msra.mxu0 0.0
      %2085 = vmatprep.mubr.f32.mxu0 0.0
      %2086 = vmatmul.mubr.f32.gmra.mrb[0].mxu0 %v2001
      %v2087 = vpop.f32.mrb[0].mxu0
      %v2088 = vadd.f32 %v1997, %v2087
      %v2089 = vpop.f32.mrb[0].mxu0
      %2090 = vdwg.mxu0
      %vm2091 = vcmask 392192
      %2092 = vst.msk [vmem:[%s470] sm:$0xff] %vm2091, %v2088
      %p2093 = scmp.lt.s32.totalorder %s25, 1
      %s2094 = scalar_select %p2093, %s25, 1
      %s2095 = smul.addr %s2094, 8
      %s2096 = scalar_lea.vmem %s14, %s2095
      // Predicated region
      $region77: #{point_replacer_forward.1} parent=75 // pred_check
        %p2097 = pneg %p342
      $region78: #{point_replacer_forward.1} parent=75 // pred_check_branch
        %2099 = sbr.rel (%p2097) target = $region80
      $region79: #{point_replacer_forward.1} parent=75 // pred_region
        _
      $region80: #{point_replacer_forward.1} parent=75 // pred_fallthru
        _
    $region76: #{point_replacer_forward.1} parent=5 // pred_fallthru
      _
    %p2100 = scmp.le.s32.totalorder 2, %s20
    // Predicated region
    $region81: #{point_replacer_forward.1} parent=5 // pred_check
      %p2101 = pneg %p2100
    $region82: #{point_replacer_forward.1} parent=5 // pred_check_branch
      %2103 = sbr.rel (%p2101) target = $region84
    $region83: #{point_replacer_forward.1} parent=5 // pred_region
      %s2104 = ssub.s32 %s20, 2
      // Predicated region
      $region85: #{point_replacer_forward.1} parent=83 // pred_check
        %p2105 = pneg %p348
      $region86: #{point_replacer_forward.1} parent=83 // pred_check_branch
        %2107 = sbr.rel (%p2105) target = $region88
      $region87: #{point_replacer_forward.1} parent=83 // pred_region
        %p2108 = scmp.lt.s32.totalorder %s26, 1
        %s2109 = scalar_select %p2108, %s26, 1
        %s2110 = smul.addr %s2109, 8
        %s2111 = scalar_lea.vmem %s14, %s2110
      $region88: #{point_replacer_forward.1} parent=83 // pred_fallthru
        _
    $region84: #{point_replacer_forward.1} parent=5 // pred_fallthru
      _
  $region6: #{point_replacer_forward.1} parent=0 // loop_footer
    %s24 = sadd.s32 1, %s20
  $region7: #{point_replacer_forward.1} parent=0 // loop_footer_branch
    %19 = sbr.rel target = $region3
  $region8: #{point_replacer_forward.1} parent=0 // loop_exit
    _

</llo_original>
